<compile_context>
chip_gen: v7x
topology: tpu7x:2x2x1
jax: 0.10.0
libtpu: 0.0.40
codegen_flags: <defaults>
</compile_context>

<pallas_src>
import jax
import jax.numpy as jnp
from jax import lax
from jax.experimental import pallas as pl
from jax.experimental.pallas import tpu as pltpu
import numpy as np

LN_EPS = 1e-5     # torch LayerNorm default eps
BN_EPS = 1e-5     # torch BatchNorm1d default eps
LEAK = 0.01       # torch LeakyReLU default negative_slope


def attention_kernel(x_ref, wqkv_ref, bqkv_ref, w0_ref, b0_ref, ln1_ref,
                     w1_ref, b1_ref, w2_ref, b2_ref, ln2_ref, o_ref):
    """Fused self-attention + MLP block for ONE batch element.

    x_ref   : (S, D)      input embeddings
    wqkv_ref: (3, D, D)   stacked (in,out)-layout q/k/v projection weights
    bqkv_ref: (3, D)      stacked q/k/v biases
    w0_ref  : (D, D), b0_ref: (1, D)
    ln1_ref : (2, D)      [gamma; beta] of LayerNorm1
    w1_ref  : (D, H), b1_ref: (1, H)   -- BatchNorm already folded in
    w2_ref  : (H, D), b2_ref: (1, D)
    ln2_ref : (2, D)      [gamma; beta] of LayerNorm2
    o_ref   : (S, D)
    """
    x = x_ref[...].astype(jnp.float32)                       # (S, D)

    # ---- q / k / v projections (single stacked weight input) ----
    q = jnp.dot(x, wqkv_ref[0], preferred_element_type=jnp.float32) + bqkv_ref[0:1, :]
    k = jnp.dot(x, wqkv_ref[1], preferred_element_type=jnp.float32) + bqkv_ref[1:2, :]
    v = jnp.dot(x, wqkv_ref[2], preferred_element_type=jnp.float32) + bqkv_ref[2:3, :]

    # ---- attention scores + softmax (no scaling, no mask: as in the module) ----
    scores = lax.dot_general(q, k, (((1,), (1,)), ((), ())),
                             preferred_element_type=jnp.float32)       # (S, S)
    m = jnp.max(scores, axis=-1, keepdims=True)
    p = jnp.exp(scores - m)
    probs = p / jnp.sum(p, axis=-1, keepdims=True)
    attn = jnp.dot(probs, v, preferred_element_type=jnp.float32)       # (S, D)

    # ---- residual + LayerNorm1, then W0 ----
    y = x + attn
    mu1 = jnp.mean(y, axis=-1, keepdims=True)
    var1 = jnp.mean(jnp.square(y - mu1), axis=-1, keepdims=True)
    y_n = (y - mu1) * lax.rsqrt(var1 + LN_EPS) * ln1_ref[0:1, :] + ln1_ref[1:2, :]
    e = jnp.dot(y_n, w0_ref[...], preferred_element_type=jnp.float32) + b0_ref[...]

    # ---- MLP: Linear -> (folded BN) + ReLU -> (Dropout = identity) -> Linear ----
    h = jnp.dot(e, w1_ref[...], preferred_element_type=jnp.float32) + b1_ref[...]
    h = jnp.maximum(h, 0.0)
    logits = jnp.dot(h, w2_ref[...], preferred_element_type=jnp.float32) + b2_ref[...]

    # ---- residual + LeakyReLU + LayerNorm2 ----
    z = logits + e
    z = jnp.where(z >= 0.0, z, LEAK * z)
    mu2 = jnp.mean(z, axis=-1, keepdims=True)
    var2 = jnp.mean(jnp.square(z - mu2), axis=-1, keepdims=True)
    out = (z - mu2) * lax.rsqrt(var2 + LN_EPS) * ln2_ref[0:1, :] + ln2_ref[1:2, :]

    o_ref[...] = out.astype(o_ref.dtype)


def attention_forward(x, params):
    """x: (N, S, D) float32 -> (N, S, D) float32."""
    n, s, d = x.shape
    hdim = params["w_mlp1"].shape[1]

    # ---- host-side parameter consolidation / BN folding ----
    wqkv = jnp.stack([params["wq"], params["wk"], params["wv"]]).astype(jnp.float32)   # (3,D,D)
    bqkv = jnp.stack([params["bq"], params["bk"], params["bv"]]).astype(jnp.float32)   # (3,D)
    bn_scale = params["bn_g"] * lax.rsqrt(params["bn_v"] + BN_EPS)                      # (H,)
    w1f = (params["w_mlp1"] * bn_scale[None, :]).astype(jnp.float32)                    # (D,H)
    b1f = ((params["b_mlp1"] - params["bn_m"]) * bn_scale + params["bn_b"])             # (H,)
    ln1 = jnp.stack([params["ln1_g"], params["ln1_b"]]).astype(jnp.float32)             # (2,D)
    ln2 = jnp.stack([params["ln2_g"], params["ln2_b"]]).astype(jnp.float32)             # (2,D)

    row = lambda v: v.reshape(1, -1).astype(jnp.float32)
    full = lambda shape: pl.BlockSpec(shape, lambda b: (0,) * len(shape))

    out = pl.pallas_call(
        attention_kernel,
        out_shape=jax.ShapeDtypeStruct((n, s, d), jnp.float32),
        grid=(n,),
        in_specs=[
            pl.BlockSpec((None, s, d), lambda b: (b, 0, 0)),   # x (one batch element)
            full((3, d, d)),                                   # wqkv
            full((3, d)),                                      # bqkv
            full((d, d)),                                      # w0
            full((1, d)),                                      # b0
            full((2, d)),                                      # ln1 gamma/beta
            full((d, hdim)),                                   # w1 (BN folded)
            full((1, hdim)),                                   # b1 (BN folded)
            full((hdim, d)),                                   # w2
            full((1, d)),                                      # b2
            full((2, d)),                                      # ln2 gamma/beta
        ],
        out_specs=pl.BlockSpec((None, s, d), lambda b: (b, 0, 0)),
        compiler_params=pltpu.CompilerParams(
            dimension_semantics=("parallel",)),                # batch -> both TCs on v7x
    )(x.astype(jnp.float32), wqkv, bqkv,
      params["w0"].astype(jnp.float32), row(params["b0"]), ln1,
      w1f, row(b1f),
      params["w_mlp2"].astype(jnp.float32), row(params["b_mlp2"]), ln2)
    return out


def _layer_norm(y, g, b):
    mu = jnp.mean(y, axis=-1, keepdims=True)
    var = jnp.mean(jnp.square(y - mu), axis=-1, keepdims=True)
    return (y - mu) * lax.rsqrt(var + LN_EPS) * g.reshape(1, 1, -1) + b.reshape(1, 1, -1)


def ref_forward(x, p):
    """Pure-JAX reference of the same forward pass (uses the UNfolded BN params)."""
    x = x.astype(jnp.float32)
    q = x @ p["wq"] + p["bq"]
    k = x @ p["wk"] + p["bk"]
    v = x @ p["wv"] + p["bv"]
    scores = jnp.einsum("bqd,bkd->bqk", q, k)
    probs = jax.nn.softmax(scores, axis=-1)
    y = _layer_norm(x + jnp.einsum("bqk,bkd->bqd", probs, v), p["ln1_g"], p["ln1_b"])
    e = y @ p["w0"] + p["b0"]
    h = e @ p["w_mlp1"] + p["b_mlp1"]
    h = ((h - p["bn_m"]) * p["bn_g"] * lax.rsqrt(p["bn_v"] + BN_EPS) + p["bn_b"])
    h = jnp.maximum(h, 0.0)                      # BnActivation = BN(inference) + ReLU
    logits = h @ p["w_mlp2"] + p["b_mlp2"]       # Dropout is identity in eval
    z = logits + e
    z = jnp.where(z >= 0.0, z, LEAK * z)
    return _layer_norm(z, p["ln2_g"], p["ln2_b"])


def make_params(key, d, hdim):
    ks = jax.random.split(key, 20)
    nrm = lambda k, s, sc: sc * jax.random.normal(k, s, jnp.float32)
    return {
        "wq": nrm(ks[0], (d, d), 0.05), "bq": nrm(ks[1], (d,), 0.05),
        "wk": nrm(ks[2], (d, d), 0.05), "bk": nrm(ks[3], (d,), 0.05),
        "wv": nrm(ks[4], (d, d), 0.05), "bv": nrm(ks[5], (d,), 0.05),
        "w0": nrm(ks[6], (d, d), 0.05), "b0": nrm(ks[7], (d,), 0.05),
        "w_mlp1": nrm(ks[8], (d, hdim), 0.05), "b_mlp1": nrm(ks[9], (hdim,), 0.05),
        "bn_g": 1.0 + nrm(ks[10], (hdim,), 0.1), "bn_b": nrm(ks[11], (hdim,), 0.1),
        "bn_m": nrm(ks[12], (hdim,), 0.1),
        "bn_v": jax.random.uniform(ks[13], (hdim,), jnp.float32, 0.5, 1.5),
        "w_mlp2": nrm(ks[14], (hdim, d), 0.05), "b_mlp2": nrm(ks[15], (d,), 0.05),
        "ln1_g": 1.0 + nrm(ks[16], (d,), 0.1), "ln1_b": nrm(ks[17], (d,), 0.1),
        "ln2_g": 1.0 + nrm(ks[18], (d,), 0.1), "ln2_b": nrm(ks[19], (d,), 0.1),
    }


if __name__ == "__main__":
    key = jax.random.PRNGKey(0)
    k_x, k_p = jax.random.split(key)

    N, S, D, H = 2, 8, 32, 2048          # hidden_size=2048 is hardcoded in the module
    x = jax.random.normal(k_x, (N, S, D), jnp.float32)
    params = make_params(k_p, D, H)

    out = jax.block_until_ready(attention_forward(x, params))
    ref = jax.block_until_ready(ref_forward(x, params))

    assert out.shape == (N, S, D), out.shape
    np.testing.assert_allclose(np.asarray(out), np.asarray(ref), rtol=2e-4, atol=2e-4)
    print("KERNEL_OK")
</pallas_src>

<mosaic_0001>
module attributes {stable_mosaic.version = 11 : i64} {
  func.func @attention_kernel(%arg0: i32, %arg1: memref<1x8x32xf32, #tpu.memory_space<vmem>>, %arg2: memref<3x32x32xf32, #tpu.memory_space<vmem>>, %arg3: memref<3x32xf32, #tpu.memory_space<vmem>>, %arg4: memref<32x32xf32, #tpu.memory_space<vmem>>, %arg5: memref<1x32xf32, #tpu.memory_space<vmem>>, %arg6: memref<2x32xf32, #tpu.memory_space<vmem>>, %arg7: memref<32x2048xf32, #tpu.memory_space<vmem>>, %arg8: memref<1x2048xf32, #tpu.memory_space<vmem>>, %arg9: memref<2048x32xf32, #tpu.memory_space<vmem>>, %arg10: memref<1x32xf32, #tpu.memory_space<vmem>>, %arg11: memref<2x32xf32, #tpu.memory_space<vmem>>, %arg12: memref<1x8x32xf32, #tpu.memory_space<vmem>>) attributes {dimension_semantics = [#tpu.dimension_semantics<parallel>], iteration_bounds = array<i64: 2>, scalar_prefetch = 0 : i64, scratch_operands = 0 : i64, tpu.core_type = #tpu.core_type<tc>, window_params = [{transform_indices = @transform_0, window_bounds = array<i64: 1, 8, 32>}, {pipeline_mode = #tpu.pipeline_mode<synchronous>, transform_indices = @transform_1, window_bounds = array<i64: 3, 32, 32>}, {pipeline_mode = #tpu.pipeline_mode<synchronous>, transform_indices = @transform_2, window_bounds = array<i64: 3, 32>}, {pipeline_mode = #tpu.pipeline_mode<synchronous>, transform_indices = @transform_3, window_bounds = array<i64: 32, 32>}, {pipeline_mode = #tpu.pipeline_mode<synchronous>, transform_indices = @transform_4, window_bounds = array<i64: 1, 32>}, {pipeline_mode = #tpu.pipeline_mode<synchronous>, transform_indices = @transform_5, window_bounds = array<i64: 2, 32>}, {pipeline_mode = #tpu.pipeline_mode<synchronous>, transform_indices = @transform_6, window_bounds = array<i64: 32, 2048>}, {pipeline_mode = #tpu.pipeline_mode<synchronous>, transform_indices = @transform_7, window_bounds = array<i64: 1, 2048>}, {pipeline_mode = #tpu.pipeline_mode<synchronous>, transform_indices = @transform_8, window_bounds = array<i64: 2048, 32>}, {pipeline_mode = #tpu.pipeline_mode<synchronous>, transform_indices = @transform_9, window_bounds = array<i64: 1, 32>}, {pipeline_mode = #tpu.pipeline_mode<synchronous>, transform_indices = @transform_10, window_bounds = array<i64: 2, 32>}, {transform_indices = @transform_11, window_bounds = array<i64: 1, 8, 32>}]} {
    %c0 = arith.constant 0 : index
    %c0_0 = arith.constant 0 : index
    %c0_1 = arith.constant 0 : index
    %0 = vector.load %arg1[%c0, %c0_0, %c0_1] : memref<1x8x32xf32, #tpu.memory_space<vmem>>, vector<1x8x32xf32>
    %1 = vector.shape_cast %0 : vector<1x8x32xf32> to vector<8x32xf32>
    %c0_2 = arith.constant 0 : index
    %c0_3 = arith.constant 0 : index
    %c0_4 = arith.constant 0 : index
    %2 = vector.load %arg2[%c0_2, %c0_3, %c0_4] : memref<3x32x32xf32, #tpu.memory_space<vmem>>, vector<1x32x32xf32>
    %3 = vector.shape_cast %2 : vector<1x32x32xf32> to vector<32x32xf32>
    %cst = arith.constant dense<0.000000e+00> : vector<8x32xf32>
    %4 = tpu.matmul %1, %3, %cst {dimension_numbers = #tpu.dot_dimension_numbers<[1], [0], [0], [1], [0, 0, 1, 1], [], []>} : vector<8x32xf32>, vector<32x32xf32>, vector<8x32xf32> -> vector<8x32xf32>
    %c0_5 = arith.constant 0 : index
    %c0_6 = arith.constant 0 : index
    %5 = vector.load %arg3[%c0_5, %c0_6] : memref<3x32xf32, #tpu.memory_space<vmem>>, vector<1x32xf32>
    %6 = vector.broadcast %5 : vector<1x32xf32> to vector<8x32xf32>
    %7 = arith.addf %4, %6 : vector<8x32xf32>
    %c1 = arith.constant 1 : index
    %c0_7 = arith.constant 0 : index
    %c0_8 = arith.constant 0 : index
    %8 = vector.load %arg2[%c1, %c0_7, %c0_8] : memref<3x32x32xf32, #tpu.memory_space<vmem>>, vector<1x32x32xf32>
    %9 = vector.shape_cast %8 : vector<1x32x32xf32> to vector<32x32xf32>
    %cst_9 = arith.constant dense<0.000000e+00> : vector<8x32xf32>
    %10 = tpu.matmul %1, %9, %cst_9 {dimension_numbers = #tpu.dot_dimension_numbers<[1], [0], [0], [1], [0, 0, 1, 1], [], []>} : vector<8x32xf32>, vector<32x32xf32>, vector<8x32xf32> -> vector<8x32xf32>
    %c1_10 = arith.constant 1 : index
    %c0_11 = arith.constant 0 : index
    %11 = vector.load %arg3[%c1_10, %c0_11] : memref<3x32xf32, #tpu.memory_space<vmem>>, vector<1x32xf32>
    %12 = vector.broadcast %11 : vector<1x32xf32> to vector<8x32xf32>
    %13 = arith.addf %10, %12 : vector<8x32xf32>
    %c2 = arith.constant 2 : index
    %c0_12 = arith.constant 0 : index
    %c0_13 = arith.constant 0 : index
    %14 = vector.load %arg2[%c2, %c0_12, %c0_13] : memref<3x32x32xf32, #tpu.memory_space<vmem>>, vector<1x32x32xf32>
    %15 = vector.shape_cast %14 : vector<1x32x32xf32> to vector<32x32xf32>
    %cst_14 = arith.constant dense<0.000000e+00> : vector<8x32xf32>
    %16 = tpu.matmul %1, %15, %cst_14 {dimension_numbers = #tpu.dot_dimension_numbers<[1], [0], [0], [1], [0, 0, 1, 1], [], []>} : vector<8x32xf32>, vector<32x32xf32>, vector<8x32xf32> -> vector<8x32xf32>
    %c2_15 = arith.constant 2 : index
    %c0_16 = arith.constant 0 : index
    %17 = vector.load %arg3[%c2_15, %c0_16] : memref<3x32xf32, #tpu.memory_space<vmem>>, vector<1x32xf32>
    %18 = vector.broadcast %17 : vector<1x32xf32> to vector<8x32xf32>
    %19 = arith.addf %16, %18 : vector<8x32xf32>
    %cst_17 = arith.constant dense<0.000000e+00> : vector<8x8xf32>
    %20 = tpu.matmul %7, %13, %cst_17 {dimension_numbers = #tpu.dot_dimension_numbers<[1], [1], [0], [0], [0, 0, 1, 0], [], []>} : vector<8x32xf32>, vector<8x32xf32>, vector<8x8xf32> -> vector<8x8xf32>
    %cst_18 = arith.constant dense<0xFF800000> : vector<8xf32>
    %21 = vector.multi_reduction <maximumf>, %20, %cst_18 [1] : vector<8x8xf32> to vector<8xf32>
    %22 = vector.shape_cast %21 : vector<8xf32> to vector<8x1xf32>
    %23 = vector.broadcast %22 : vector<8x1xf32> to vector<8x8xf32>
    %24 = arith.subf %20, %23 : vector<8x8xf32>
    %25 = math.exp %24 : vector<8x8xf32>
    %cst_19 = arith.constant dense<0.000000e+00> : vector<8xf32>
    %26 = vector.multi_reduction <add>, %25, %cst_19 [1] : vector<8x8xf32> to vector<8xf32>
    %27 = vector.shape_cast %26 : vector<8xf32> to vector<8x1xf32>
    %28 = vector.broadcast %27 : vector<8x1xf32> to vector<8x8xf32>
    %29 = arith.divf %25, %28 : vector<8x8xf32>
    %cst_20 = arith.constant dense<0.000000e+00> : vector<8x32xf32>
    %30 = tpu.matmul %29, %19, %cst_20 {dimension_numbers = #tpu.dot_dimension_numbers<[1], [0], [0], [1], [0, 0, 1, 1], [], []>} : vector<8x8xf32>, vector<8x32xf32>, vector<8x32xf32> -> vector<8x32xf32>
    %31 = arith.addf %1, %30 : vector<8x32xf32>
    %cst_21 = arith.constant dense<0.000000e+00> : vector<8xf32>
    %32 = vector.multi_reduction <add>, %31, %cst_21 [1] : vector<8x32xf32> to vector<8xf32>
    %33 = vector.shape_cast %32 : vector<8xf32> to vector<8x1xf32>
    %cst_22 = arith.constant 3.200000e+01 : f32
    %34 = vector.broadcast %cst_22 : f32 to vector<8x1xf32>
    %35 = arith.divf %33, %34 : vector<8x1xf32>
    %36 = vector.broadcast %35 : vector<8x1xf32> to vector<8x32xf32>
    %37 = arith.subf %31, %36 : vector<8x32xf32>
    %38 = arith.mulf %37, %37 : vector<8x32xf32>
    %cst_23 = arith.constant dense<0.000000e+00> : vector<8xf32>
    %39 = vector.multi_reduction <add>, %38, %cst_23 [1] : vector<8x32xf32> to vector<8xf32>
    %40 = vector.shape_cast %39 : vector<8xf32> to vector<8x1xf32>
    %cst_24 = arith.constant 3.200000e+01 : f32
    %41 = vector.broadcast %cst_24 : f32 to vector<8x1xf32>
    %42 = arith.divf %40, %41 : vector<8x1xf32>
    %43 = vector.broadcast %35 : vector<8x1xf32> to vector<8x32xf32>
    %44 = arith.subf %31, %43 : vector<8x32xf32>
    %cst_25 = arith.constant 9.99999974E-6 : f32
    %45 = vector.broadcast %cst_25 : f32 to vector<8x1xf32>
    %46 = arith.addf %42, %45 : vector<8x1xf32>
    %47 = math.rsqrt %46 : vector<8x1xf32>
    %48 = vector.broadcast %47 : vector<8x1xf32> to vector<8x32xf32>
    %49 = arith.mulf %44, %48 : vector<8x32xf32>
    %c0_26 = arith.constant 0 : index
    %c0_27 = arith.constant 0 : index
    %50 = vector.load %arg6[%c0_26, %c0_27] : memref<2x32xf32, #tpu.memory_space<vmem>>, vector<1x32xf32>
    %51 = vector.broadcast %50 : vector<1x32xf32> to vector<8x32xf32>
    %52 = arith.mulf %49, %51 : vector<8x32xf32>
    %c1_28 = arith.constant 1 : index
    %c0_29 = arith.constant 0 : index
    %53 = vector.load %arg6[%c1_28, %c0_29] : memref<2x32xf32, #tpu.memory_space<vmem>>, vector<1x32xf32>
    %54 = vector.broadcast %53 : vector<1x32xf32> to vector<8x32xf32>
    %55 = arith.addf %52, %54 : vector<8x32xf32>
    %c0_30 = arith.constant 0 : index
    %c0_31 = arith.constant 0 : index
    %56 = vector.load %arg4[%c0_30, %c0_31] : memref<32x32xf32, #tpu.memory_space<vmem>>, vector<32x32xf32>
    %cst_32 = arith.constant dense<0.000000e+00> : vector<8x32xf32>
    %57 = tpu.matmul %55, %56, %cst_32 {dimension_numbers = #tpu.dot_dimension_numbers<[1], [0], [0], [1], [0, 0, 1, 1], [], []>} : vector<8x32xf32>, vector<32x32xf32>, vector<8x32xf32> -> vector<8x32xf32>
    %c0_33 = arith.constant 0 : index
    %c0_34 = arith.constant 0 : index
    %58 = vector.load %arg5[%c0_33, %c0_34] : memref<1x32xf32, #tpu.memory_space<vmem>>, vector<1x32xf32>
    %59 = vector.broadcast %58 : vector<1x32xf32> to vector<8x32xf32>
    %60 = arith.addf %57, %59 : vector<8x32xf32>
    %c0_35 = arith.constant 0 : index
    %c0_36 = arith.constant 0 : index
    %61 = vector.load %arg7[%c0_35, %c0_36] : memref<32x2048xf32, #tpu.memory_space<vmem>>, vector<32x2048xf32>
    %cst_37 = arith.constant dense<0.000000e+00> : vector<8x2048xf32>
    %62 = tpu.matmul %60, %61, %cst_37 {dimension_numbers = #tpu.dot_dimension_numbers<[1], [0], [0], [1], [0, 0, 1, 1], [], []>} : vector<8x32xf32>, vector<32x2048xf32>, vector<8x2048xf32> -> vector<8x2048xf32>
    %c0_38 = arith.constant 0 : index
    %c0_39 = arith.constant 0 : index
    %63 = vector.load %arg8[%c0_38, %c0_39] : memref<1x2048xf32, #tpu.memory_space<vmem>>, vector<1x2048xf32>
    %64 = vector.broadcast %63 : vector<1x2048xf32> to vector<8x2048xf32>
    %65 = arith.addf %62, %64 : vector<8x2048xf32>
    %cst_40 = arith.constant 0.000000e+00 : f32
    %66 = vector.broadcast %cst_40 : f32 to vector<8x2048xf32>
    %67 = arith.maximumf %65, %66 : vector<8x2048xf32>
    %c0_41 = arith.constant 0 : index
    %c0_42 = arith.constant 0 : index
    %68 = vector.load %arg9[%c0_41, %c0_42] : memref<2048x32xf32, #tpu.memory_space<vmem>>, vector<2048x32xf32>
    %cst_43 = arith.constant dense<0.000000e+00> : vector<8x32xf32>
    %69 = tpu.matmul %67, %68, %cst_43 {dimension_numbers = #tpu.dot_dimension_numbers<[1], [0], [0], [1], [0, 0, 1, 1], [], []>} : vector<8x2048xf32>, vector<2048x32xf32>, vector<8x32xf32> -> vector<8x32xf32>
    %c0_44 = arith.constant 0 : index
    %c0_45 = arith.constant 0 : index
    %70 = vector.load %arg10[%c0_44, %c0_45] : memref<1x32xf32, #tpu.memory_space<vmem>>, vector<1x32xf32>
    %71 = vector.broadcast %70 : vector<1x32xf32> to vector<8x32xf32>
    %72 = arith.addf %69, %71 : vector<8x32xf32>
    %73 = arith.addf %72, %60 : vector<8x32xf32>
    %cst_46 = arith.constant 0.000000e+00 : f32
    %74 = vector.broadcast %cst_46 : f32 to vector<8x32xf32>
    %75 = arith.cmpf oge, %73, %74 : vector<8x32xf32>
    %cst_47 = arith.constant 0.00999999977 : f32
    %76 = vector.broadcast %cst_47 : f32 to vector<8x32xf32>
    %77 = arith.mulf %76, %73 : vector<8x32xf32>
    %78 = arith.select %75, %73, %77 : vector<8x32xi1>, vector<8x32xf32>
    %cst_48 = arith.constant dense<0.000000e+00> : vector<8xf32>
    %79 = vector.multi_reduction <add>, %78, %cst_48 [1] : vector<8x32xf32> to vector<8xf32>
    %80 = vector.shape_cast %79 : vector<8xf32> to vector<8x1xf32>
    %cst_49 = arith.constant 3.200000e+01 : f32
    %81 = vector.broadcast %cst_49 : f32 to vector<8x1xf32>
    %82 = arith.divf %80, %81 : vector<8x1xf32>
    %83 = vector.broadcast %82 : vector<8x1xf32> to vector<8x32xf32>
    %84 = arith.subf %78, %83 : vector<8x32xf32>
    %85 = arith.mulf %84, %84 : vector<8x32xf32>
    %cst_50 = arith.constant dense<0.000000e+00> : vector<8xf32>
    %86 = vector.multi_reduction <add>, %85, %cst_50 [1] : vector<8x32xf32> to vector<8xf32>
    %87 = vector.shape_cast %86 : vector<8xf32> to vector<8x1xf32>
    %cst_51 = arith.constant 3.200000e+01 : f32
    %88 = vector.broadcast %cst_51 : f32 to vector<8x1xf32>
    %89 = arith.divf %87, %88 : vector<8x1xf32>
    %90 = vector.broadcast %82 : vector<8x1xf32> to vector<8x32xf32>
    %91 = arith.subf %78, %90 : vector<8x32xf32>
    %cst_52 = arith.constant 9.99999974E-6 : f32
    %92 = vector.broadcast %cst_52 : f32 to vector<8x1xf32>
    %93 = arith.addf %89, %92 : vector<8x1xf32>
    %94 = math.rsqrt %93 : vector<8x1xf32>
    %95 = vector.broadcast %94 : vector<8x1xf32> to vector<8x32xf32>
    %96 = arith.mulf %91, %95 : vector<8x32xf32>
    %c0_53 = arith.constant 0 : index
    %c0_54 = arith.constant 0 : index
    %97 = vector.load %arg11[%c0_53, %c0_54] : memref<2x32xf32, #tpu.memory_space<vmem>>, vector<1x32xf32>
    %98 = vector.broadcast %97 : vector<1x32xf32> to vector<8x32xf32>
    %99 = arith.mulf %96, %98 : vector<8x32xf32>
    %c1_55 = arith.constant 1 : index
    %c0_56 = arith.constant 0 : index
    %100 = vector.load %arg11[%c1_55, %c0_56] : memref<2x32xf32, #tpu.memory_space<vmem>>, vector<1x32xf32>
    %101 = vector.broadcast %100 : vector<1x32xf32> to vector<8x32xf32>
    %102 = arith.addf %99, %101 : vector<8x32xf32>
    %c0_57 = arith.constant 0 : index
    %c0_58 = arith.constant 0 : index
    %c0_59 = arith.constant 0 : index
    %103 = vector.load %arg12[%c0_57, %c0_58, %c0_59] : memref<1x8x32xf32, #tpu.memory_space<vmem>>, vector<1x8x32xf32>
    %104 = vector.shape_cast %103 : vector<1x8x32xf32> to vector<8x32xf32>
    %105 = vector.shape_cast %102 : vector<8x32xf32> to vector<1x8x32xf32>
    tpu.vector_store %arg12[%c0_57, %c0_58, %c0_59], %105 {strides = array<i32>} : memref<1x8x32xf32, #tpu.memory_space<vmem>>, vector<1x8x32xf32>,
    return
  }
  func.func @transform_0(%arg0: i32) -> (i32, i32, i32) {
    %c0_i32 = arith.constant 0 : i32
    %c0_i32_0 = arith.constant 0 : i32
    %c0_i32_1 = arith.constant 0 : i32
    return %arg0, %c0_i32, %c0_i32_0 : i32, i32, i32
  }
  func.func @transform_1(%arg0: i32) -> (i32, i32, i32) {
    %c0_i32 = arith.constant 0 : i32
    %c0_i32_0 = arith.constant 0 : i32
    %c0_i32_1 = arith.constant 0 : i32
    %c0_i32_2 = arith.constant 0 : i32
    return %c0_i32, %c0_i32_0, %c0_i32_1 : i32, i32, i32
  }
  func.func @transform_2(%arg0: i32) -> (i32, i32) {
    %c0_i32 = arith.constant 0 : i32
    %c0_i32_0 = arith.constant 0 : i32
    %c0_i32_1 = arith.constant 0 : i32
    return %c0_i32, %c0_i32_0 : i32, i32
  }
  func.func @transform_3(%arg0: i32) -> (i32, i32) {
    %c0_i32 = arith.constant 0 : i32
    %c0_i32_0 = arith.constant 0 : i32
    %c0_i32_1 = arith.constant 0 : i32
    return %c0_i32, %c0_i32_0 : i32, i32
  }
  func.func @transform_4(%arg0: i32) -> (i32, i32) {
    %c0_i32 = arith.constant 0 : i32
    %c0_i32_0 = arith.constant 0 : i32
    %c0_i32_1 = arith.constant 0 : i32
    return %c0_i32, %c0_i32_0 : i32, i32
  }
  func.func @transform_5(%arg0: i32) -> (i32, i32) {
    %c0_i32 = arith.constant 0 : i32
    %c0_i32_0 = arith.constant 0 : i32
    %c0_i32_1 = arith.constant 0 : i32
    return %c0_i32, %c0_i32_0 : i32, i32
  }
  func.func @transform_6(%arg0: i32) -> (i32, i32) {
    %c0_i32 = arith.constant 0 : i32
    %c0_i32_0 = arith.constant 0 : i32
    %c0_i32_1 = arith.constant 0 : i32
    return %c0_i32, %c0_i32_0 : i32, i32
  }
  func.func @transform_7(%arg0: i32) -> (i32, i32) {
    %c0_i32 = arith.constant 0 : i32
    %c0_i32_0 = arith.constant 0 : i32
    %c0_i32_1 = arith.constant 0 : i32
    return %c0_i32, %c0_i32_0 : i32, i32
  }
  func.func @transform_8(%arg0: i32) -> (i32, i32) {
    %c0_i32 = arith.constant 0 : i32
    %c0_i32_0 = arith.constant 0 : i32
    %c0_i32_1 = arith.constant 0 : i32
    return %c0_i32, %c0_i32_0 : i32, i32
  }
  func.func @transform_9(%arg0: i32) -> (i32, i32) {
    %c0_i32 = arith.constant 0 : i32
    %c0_i32_0 = arith.constant 0 : i32
    %c0_i32_1 = arith.constant 0 : i32
    return %c0_i32, %c0_i32_0 : i32, i32
  }
  func.func @transform_10(%arg0: i32) -> (i32, i32) {
    %c0_i32 = arith.constant 0 : i32
    %c0_i32_0 = arith.constant 0 : i32
    %c0_i32_1 = arith.constant 0 : i32
    return %c0_i32, %c0_i32_0 : i32, i32
  }
  func.func @transform_11(%arg0: i32) -> (i32, i32, i32) {
    %c0_i32 = arith.constant 0 : i32
    %c0_i32_0 = arith.constant 0 : i32
    %c0_i32_1 = arith.constant 0 : i32
    return %arg0, %c0_i32, %c0_i32_0 : i32, i32, i32
  }
}

</mosaic_0001>

<llo_original>
// kernel: tpu_custom_call.1
$region0: #{tpu_custom_call.1}
  #allocation0 [shape = 'u32[]', space=smem, size = 0x4, offset = 0x4, fixed_abs, tag = 'smem constant byte address 0x4 - core index']
  #allocation1 [shape = 'u32[144,128]{1,0:T(1,128)}', space=vmem, size = 0x12000, scoped, tag = 'internal scratch']
  %s0 = inlined_call_operand.vmem [shape: f32[2,8,32], index: 0, kind: input, shape index: {}]
  %s1 = inlined_call_operand.vmem [shape: f32[3,32,32], index: 1, kind: input, shape index: {}]
  %s2 = inlined_call_operand.vmem [shape: f32[3,32], index: 2, kind: input, shape index: {}]
  %s3 = inlined_call_operand.vmem [shape: f32[32,32], index: 3, kind: input, shape index: {}]
  %s4 = inlined_call_operand.vmem [shape: f32[1,32], index: 4, kind: input, shape index: {}]
  %s5 = inlined_call_operand.vmem [shape: f32[2,32], index: 5, kind: input, shape index: {}]
  %s6 = inlined_call_operand.vmem [shape: f32[32,2048], index: 6, kind: input, shape index: {}]
  %s7 = inlined_call_operand.vmem [shape: f32[1,2048], index: 7, kind: input, shape index: {}]
  %s8 = inlined_call_operand.vmem [shape: f32[2048,32], index: 8, kind: input, shape index: {}]
  %s9 = inlined_call_operand.vmem [shape: f32[1,32], index: 9, kind: input, shape index: {}]
  %s10 = inlined_call_operand.vmem [shape: f32[2,32], index: 10, kind: input, shape index: {}]
  %s11 = inlined_call_operand.hbm [shape: f32[2,8,32], index: 11, kind: output, shape index: {}]
  %s12 = sld [smem:[#allocation0]]
  $region77: #{tpu_custom_call.1} parent=0
    _
  %s14 = ssub.s32 1, %s12
  %s15 = scalar_select 0, %s14, %s12
  $region1: #{tpu_custom_call.1} parent=0
    #allocation2 [shape = 'u8[8192]{0}', space=vmem, size = 0x2000, scoped, tag = 'output window, operand 0']
    #allocation3 [shape = 's32[2]{0}', space=sflag, size = 0x8, scoped, tag = 'scoped memory for tpu_custom_call.1']
    %16 = vsyncpa [#allocation3], 0
    %s17 = scalar_lea.sflag [#allocation3], 1
    %18 = vsyncpa %s17, 0
    loop: start=0, step=1, limit=4
    $region2: #{tpu_custom_call.1} parent=1 // loop_pre_header
      _
    $region3: #{tpu_custom_call.1} parent=1 // loop_header
      %s20 = sphi 0, %s24
      %p21 = scmp.ge.s32.totalorder %s20, 4
      %s30 = sphi 0, %s32
      %s33 = sphi 0, %s30
      %s34 = sphi 0, %s33
      %s50 = sphi 0, %s34
      %s54 = sphi 0, %s54
      %s56 = sphi 0, %s54
      %s57 = sphi 0, %s56
      %s71 = sphi 0, %s57
      %s75 = sphi 0, %s75
      %s77 = sphi 0, %s75
      %s78 = sphi 0, %s77
      %s92 = sphi 0, %s78
      %s96 = sphi 0, %s96
      %s98 = sphi 0, %s96
      %s99 = sphi 0, %s98
      %s113 = sphi 0, %s99
      %s117 = sphi 0, %s117
      %s119 = sphi 0, %s117
      %s120 = sphi 0, %s119
      %s134 = sphi 0, %s120
      %s138 = sphi 0, %s138
      %s140 = sphi 0, %s138
      %s141 = sphi 0, %s140
      %s155 = sphi 0, %s141
      %s159 = sphi 0, %s159
      %s161 = sphi 0, %s159
      %s162 = sphi 0, %s161
      %s176 = sphi 0, %s162
      %s180 = sphi 0, %s180
      %s182 = sphi 0, %s180
      %s183 = sphi 0, %s182
      %s197 = sphi 0, %s183
      %s201 = sphi 0, %s201
      %s203 = sphi 0, %s201
      %s204 = sphi 0, %s203
      %s218 = sphi 0, %s204
      %s222 = sphi 0, %s222
      %s224 = sphi 0, %s222
      %s225 = sphi 0, %s224
      %s239 = sphi 0, %s225
      %s243 = sphi 0, %s243
      %s245 = sphi 0, %s243
      %s246 = sphi 0, %s245
      %s260 = sphi 0, %s246
      %s266 = sphi 0, %s268
      %s269 = sphi 0, %s266
      %s270 = sphi 0, %s269
      %s286 = sphi 0, %s270
    $region4: #{tpu_custom_call.1} parent=1 // loop_header_branch
      %23 = sbr.rel (%p21) target = $region8
    $region5: #{tpu_custom_call.1} parent=1 // loop_body
      %s25 = ssub.s32 %s20, 1
      %s26 = ssub.s32 %s20, 2
      %s27 = sadd.s32 %s20, 1
      %s28 = ssub.s32 %s20, %s27
      %p29 = scmp.eq.s32.totalorder %s28, 0
      %s31 = sadd.s32 %s30, 1
      %s32 = scalar_select %p29, %s30, %s31
      %p35 = pneg %p29
      %p36 = scmp.eq.s32.totalorder %s20, 1
      %p37 = por %p35, %p36
      %p38 = scmp.ne.s32.totalorder %s30, %s33
      %p39 = scmp.eq.s32.totalorder %s20, 0
      %p40 = por %p38, %p39
      %p41 = scmp.ne.s32.totalorder %s30, %s33
      %p42 = scmp.eq.s32.totalorder %s25, 1
      %p43 = por %p41, %p42
      %p44 = scmp.ne.s32.totalorder %s33, %s34
      %p45 = scmp.eq.s32.totalorder %s25, 0
      %p46 = por %p44, %p45
      %p47 = scmp.ne.s32.totalorder %s33, %s34
      %p48 = scmp.eq.s32.totalorder %s26, 1
      %p49 = por %p47, %p48
      %p51 = scmp.ne.s32.totalorder %s34, %s50
      %p52 = scmp.eq.s32.totalorder %s26, 0
      %p53 = por %p51, %p52
      %s55 = sadd.s32 %s54, 1
      %p58 = scmp.eq.s32.totalorder %s20, 1
      %p59 = scmp.ne.s32.totalorder %s54, %s56
      %p60 = scmp.eq.s32.totalorder %s20, 0
      %p61 = por %p59, %p60
      %p62 = scmp.ne.s32.totalorder %s54, %s56
      %p63 = scmp.eq.s32.totalorder %s25, 1
      %p64 = por %p62, %p63
      %p65 = scmp.ne.s32.totalorder %s56, %s57
      %p66 = scmp.eq.s32.totalorder %s25, 0
      %p67 = por %p65, %p66
      %p68 = scmp.ne.s32.totalorder %s56, %s57
      %p69 = scmp.eq.s32.totalorder %s26, 1
      %p70 = por %p68, %p69
      %p72 = scmp.ne.s32.totalorder %s57, %s71
      %p73 = scmp.eq.s32.totalorder %s26, 0
      %p74 = por %p72, %p73
      %s76 = sadd.s32 %s75, 1
      %p79 = scmp.eq.s32.totalorder %s20, 1
      %p80 = scmp.ne.s32.totalorder %s75, %s77
      %p81 = scmp.eq.s32.totalorder %s20, 0
      %p82 = por %p80, %p81
      %p83 = scmp.ne.s32.totalorder %s75, %s77
      %p84 = scmp.eq.s32.totalorder %s25, 1
      %p85 = por %p83, %p84
      %p86 = scmp.ne.s32.totalorder %s77, %s78
      %p87 = scmp.eq.s32.totalorder %s25, 0
      %p88 = por %p86, %p87
      %p89 = scmp.ne.s32.totalorder %s77, %s78
      %p90 = scmp.eq.s32.totalorder %s26, 1
      %p91 = por %p89, %p90
      %p93 = scmp.ne.s32.totalorder %s78, %s92
      %p94 = scmp.eq.s32.totalorder %s26, 0
      %p95 = por %p93, %p94
      %s97 = sadd.s32 %s96, 1
      %p100 = scmp.eq.s32.totalorder %s20, 1
      %p101 = scmp.ne.s32.totalorder %s96, %s98
      %p102 = scmp.eq.s32.totalorder %s20, 0
      %p103 = por %p101, %p102
      %p104 = scmp.ne.s32.totalorder %s96, %s98
      %p105 = scmp.eq.s32.totalorder %s25, 1
      %p106 = por %p104, %p105
      %p107 = scmp.ne.s32.totalorder %s98, %s99
      %p108 = scmp.eq.s32.totalorder %s25, 0
      %p109 = por %p107, %p108
      %p110 = scmp.ne.s32.totalorder %s98, %s99
      %p111 = scmp.eq.s32.totalorder %s26, 1
      %p112 = por %p110, %p111
      %p114 = scmp.ne.s32.totalorder %s99, %s113
      %p115 = scmp.eq.s32.totalorder %s26, 0
      %p116 = por %p114, %p115
      %s118 = sadd.s32 %s117, 1
      %p121 = scmp.eq.s32.totalorder %s20, 1
      %p122 = scmp.ne.s32.totalorder %s117, %s119
      %p123 = scmp.eq.s32.totalorder %s20, 0
      %p124 = por %p122, %p123
      %p125 = scmp.ne.s32.totalorder %s117, %s119
      %p126 = scmp.eq.s32.totalorder %s25, 1
      %p127 = por %p125, %p126
      %p128 = scmp.ne.s32.totalorder %s119, %s120
      %p129 = scmp.eq.s32.totalorder %s25, 0
      %p130 = por %p128, %p129
      %p131 = scmp.ne.s32.totalorder %s119, %s120
      %p132 = scmp.eq.s32.totalorder %s26, 1
      %p133 = por %p131, %p132
      %p135 = scmp.ne.s32.totalorder %s120, %s134
      %p136 = scmp.eq.s32.totalorder %s26, 0
      %p137 = por %p135, %p136
      %s139 = sadd.s32 %s138, 1
      %p142 = scmp.eq.s32.totalorder %s20, 1
      %p143 = scmp.ne.s32.totalorder %s138, %s140
      %p144 = scmp.eq.s32.totalorder %s20, 0
      %p145 = por %p143, %p144
      %p146 = scmp.ne.s32.totalorder %s138, %s140
      %p147 = scmp.eq.s32.totalorder %s25, 1
      %p148 = por %p146, %p147
      %p149 = scmp.ne.s32.totalorder %s140, %s141
      %p150 = scmp.eq.s32.totalorder %s25, 0
      %p151 = por %p149, %p150
      %p152 = scmp.ne.s32.totalorder %s140, %s141
      %p153 = scmp.eq.s32.totalorder %s26, 1
      %p154 = por %p152, %p153
      %p156 = scmp.ne.s32.totalorder %s141, %s155
      %p157 = scmp.eq.s32.totalorder %s26, 0
      %p158 = por %p156, %p157
      %s160 = sadd.s32 %s159, 1
      %p163 = scmp.eq.s32.totalorder %s20, 1
      %p164 = scmp.ne.s32.totalorder %s159, %s161
      %p165 = scmp.eq.s32.totalorder %s20, 0
      %p166 = por %p164, %p165
      %p167 = scmp.ne.s32.totalorder %s159, %s161
      %p168 = scmp.eq.s32.totalorder %s25, 1
      %p169 = por %p167, %p168
      %p170 = scmp.ne.s32.totalorder %s161, %s162
      %p171 = scmp.eq.s32.totalorder %s25, 0
      %p172 = por %p170, %p171
      %p173 = scmp.ne.s32.totalorder %s161, %s162
      %p174 = scmp.eq.s32.totalorder %s26, 1
      %p175 = por %p173, %p174
      %p177 = scmp.ne.s32.totalorder %s162, %s176
      %p178 = scmp.eq.s32.totalorder %s26, 0
      %p179 = por %p177, %p178
      %s181 = sadd.s32 %s180, 1
      %p184 = scmp.eq.s32.totalorder %s20, 1
      %p185 = scmp.ne.s32.totalorder %s180, %s182
      %p186 = scmp.eq.s32.totalorder %s20, 0
      %p187 = por %p185, %p186
      %p188 = scmp.ne.s32.totalorder %s180, %s182
      %p189 = scmp.eq.s32.totalorder %s25, 1
      %p190 = por %p188, %p189
      %p191 = scmp.ne.s32.totalorder %s182, %s183
      %p192 = scmp.eq.s32.totalorder %s25, 0
      %p193 = por %p191, %p192
      %p194 = scmp.ne.s32.totalorder %s182, %s183
      %p195 = scmp.eq.s32.totalorder %s26, 1
      %p196 = por %p194, %p195
      %p198 = scmp.ne.s32.totalorder %s183, %s197
      %p199 = scmp.eq.s32.totalorder %s26, 0
      %p200 = por %p198, %p199
      %s202 = sadd.s32 %s201, 1
      %p205 = scmp.eq.s32.totalorder %s20, 1
      %p206 = scmp.ne.s32.totalorder %s201, %s203
      %p207 = scmp.eq.s32.totalorder %s20, 0
      %p208 = por %p206, %p207
      %p209 = scmp.ne.s32.totalorder %s201, %s203
      %p210 = scmp.eq.s32.totalorder %s25, 1
      %p211 = por %p209, %p210
      %p212 = scmp.ne.s32.totalorder %s203, %s204
      %p213 = scmp.eq.s32.totalorder %s25, 0
      %p214 = por %p212, %p213
      %p215 = scmp.ne.s32.totalorder %s203, %s204
      %p216 = scmp.eq.s32.totalorder %s26, 1
      %p217 = por %p215, %p216
      %p219 = scmp.ne.s32.totalorder %s204, %s218
      %p220 = scmp.eq.s32.totalorder %s26, 0
      %p221 = por %p219, %p220
      %s223 = sadd.s32 %s222, 1
      %p226 = scmp.eq.s32.totalorder %s20, 1
      %p227 = scmp.ne.s32.totalorder %s222, %s224
      %p228 = scmp.eq.s32.totalorder %s20, 0
      %p229 = por %p227, %p228
      %p230 = scmp.ne.s32.totalorder %s222, %s224
      %p231 = scmp.eq.s32.totalorder %s25, 1
      %p232 = por %p230, %p231
      %p233 = scmp.ne.s32.totalorder %s224, %s225
      %p234 = scmp.eq.s32.totalorder %s25, 0
      %p235 = por %p233, %p234
      %p236 = scmp.ne.s32.totalorder %s224, %s225
      %p237 = scmp.eq.s32.totalorder %s26, 1
      %p238 = por %p236, %p237
      %p240 = scmp.ne.s32.totalorder %s225, %s239
      %p241 = scmp.eq.s32.totalorder %s26, 0
      %p242 = por %p240, %p241
      %s244 = sadd.s32 %s243, 1
      %p247 = scmp.eq.s32.totalorder %s20, 1
      %p248 = scmp.ne.s32.totalorder %s243, %s245
      %p249 = scmp.eq.s32.totalorder %s20, 0
      %p250 = por %p248, %p249
      %p251 = scmp.ne.s32.totalorder %s243, %s245
      %p252 = scmp.eq.s32.totalorder %s25, 1
      %p253 = por %p251, %p252
      %p254 = scmp.ne.s32.totalorder %s245, %s246
      %p255 = scmp.eq.s32.totalorder %s25, 0
      %p256 = por %p254, %p255
      %p257 = scmp.ne.s32.totalorder %s245, %s246
      %p258 = scmp.eq.s32.totalorder %s26, 1
      %p259 = por %p257, %p258
      %p261 = scmp.ne.s32.totalorder %s246, %s260
      %p262 = scmp.eq.s32.totalorder %s26, 0
      %p263 = por %p261, %p262
      %s264 = ssub.s32 %s20, %s27
      %p265 = scmp.eq.s32.totalorder %s264, 0
      %s267 = sadd.s32 %s266, 1
      %s268 = scalar_select %p265, %s266, %s267
      %p271 = pneg %p265
      %p272 = scmp.eq.s32.totalorder %s20, 1
      %p273 = por %p271, %p272
      %p274 = scmp.ne.s32.totalorder %s266, %s269
      %p275 = scmp.eq.s32.totalorder %s20, 0
      %p276 = por %p274, %p275
      %p277 = scmp.ne.s32.totalorder %s266, %s269
      %p278 = scmp.eq.s32.totalorder %s25, 1
      %p279 = por %p277, %p278
      %p280 = scmp.ne.s32.totalorder %s269, %s270
      %p281 = scmp.eq.s32.totalorder %s25, 0
      %p282 = por %p280, %p281
      %p283 = scmp.ne.s32.totalorder %s269, %s270
      %p284 = scmp.eq.s32.totalorder %s26, 1
      %p285 = por %p283, %p284
      %p287 = scmp.ne.s32.totalorder %s270, %s286
      %p288 = scmp.eq.s32.totalorder %s26, 0
      %p289 = por %p287, %p288
      %p290 = scmp.le.s32.totalorder 1, %s20
      %p291 = scmp.lt.s32.totalorder %s20, 3
      %p292 = pnand %p290, %p291
      %p293 = pneg %p292
      // Predicated region
      $region9: #{tpu_custom_call.1} parent=5 // pred_check
        _
      $region10: #{tpu_custom_call.1} parent=5 // pred_check_branch
        %295 = sbr.rel (%p292) target = $region12
      $region11: #{tpu_custom_call.1} parent=5 // pred_region
        %s296 = ssub.s32 %s20, 1
        // Predicated region
        $region13: #{tpu_custom_call.1} parent=11 // pred_check
          %p297 = pneg %p67
        $region14: #{tpu_custom_call.1} parent=11 // pred_check_branch
          %299 = sbr.rel (%p297) target = $region16
        $region15: #{tpu_custom_call.1} parent=11 // pred_region
          _
        $region16: #{tpu_custom_call.1} parent=11 // pred_fallthru
          _
        // Predicated region
        $region17: #{tpu_custom_call.1} parent=11 // pred_check
          %p300 = pneg %p88
        $region18: #{tpu_custom_call.1} parent=11 // pred_check_branch
          %302 = sbr.rel (%p300) target = $region20
        $region19: #{tpu_custom_call.1} parent=11 // pred_region
          _
        $region20: #{tpu_custom_call.1} parent=11 // pred_fallthru
          _
        // Predicated region
        $region21: #{tpu_custom_call.1} parent=11 // pred_check
          %p303 = pneg %p109
        $region22: #{tpu_custom_call.1} parent=11 // pred_check_branch
          %305 = sbr.rel (%p303) target = $region24
        $region23: #{tpu_custom_call.1} parent=11 // pred_region
          _
        $region24: #{tpu_custom_call.1} parent=11 // pred_fallthru
          _
        // Predicated region
        $region25: #{tpu_custom_call.1} parent=11 // pred_check
          %p306 = pneg %p130
        $region26: #{tpu_custom_call.1} parent=11 // pred_check_branch
          %308 = sbr.rel (%p306) target = $region28
        $region27: #{tpu_custom_call.1} parent=11 // pred_region
          _
        $region28: #{tpu_custom_call.1} parent=11 // pred_fallthru
          _
        // Predicated region
        $region29: #{tpu_custom_call.1} parent=11 // pred_check
          %p309 = pneg %p151
        $region30: #{tpu_custom_call.1} parent=11 // pred_check_branch
          %311 = sbr.rel (%p309) target = $region32
        $region31: #{tpu_custom_call.1} parent=11 // pred_region
          _
        $region32: #{tpu_custom_call.1} parent=11 // pred_fallthru
          _
        // Predicated region
        $region33: #{tpu_custom_call.1} parent=11 // pred_check
          %p312 = pneg %p172
        $region34: #{tpu_custom_call.1} parent=11 // pred_check_branch
          %314 = sbr.rel (%p312) target = $region36
        $region35: #{tpu_custom_call.1} parent=11 // pred_region
          _
        $region36: #{tpu_custom_call.1} parent=11 // pred_fallthru
          _
        // Predicated region
        $region37: #{tpu_custom_call.1} parent=11 // pred_check
          %p315 = pneg %p193
        $region38: #{tpu_custom_call.1} parent=11 // pred_check_branch
          %317 = sbr.rel (%p315) target = $region40
        $region39: #{tpu_custom_call.1} parent=11 // pred_region
          _
        $region40: #{tpu_custom_call.1} parent=11 // pred_fallthru
          _
        // Predicated region
        $region41: #{tpu_custom_call.1} parent=11 // pred_check
          %p318 = pneg %p214
        $region42: #{tpu_custom_call.1} parent=11 // pred_check_branch
          %320 = sbr.rel (%p318) target = $region44
        $region43: #{tpu_custom_call.1} parent=11 // pred_region
          _
        $region44: #{tpu_custom_call.1} parent=11 // pred_fallthru
          _
        // Predicated region
        $region45: #{tpu_custom_call.1} parent=11 // pred_check
          %p321 = pneg %p235
        $region46: #{tpu_custom_call.1} parent=11 // pred_check_branch
          %323 = sbr.rel (%p321) target = $region48
        $region47: #{tpu_custom_call.1} parent=11 // pred_region
          _
        $region48: #{tpu_custom_call.1} parent=11 // pred_fallthru
          _
        // Predicated region
        $region49: #{tpu_custom_call.1} parent=11 // pred_check
          %p324 = pneg %p256
        $region50: #{tpu_custom_call.1} parent=11 // pred_check_branch
          %326 = sbr.rel (%p324) target = $region52
        $region51: #{tpu_custom_call.1} parent=11 // pred_region
          _
        $region52: #{tpu_custom_call.1} parent=11 // pred_fallthru
          _
      $region12: #{tpu_custom_call.1} parent=5 // pred_fallthru
        _
      %p327 = scmp.lt.s32.totalorder %s20, 2
      // Predicated region
      $region53: #{tpu_custom_call.1} parent=5 // pred_check
        %p328 = pneg %p327
      $region54: #{tpu_custom_call.1} parent=5 // pred_check_branch
        %330 = sbr.rel (%p328) target = $region56
      $region55: #{tpu_custom_call.1} parent=5 // pred_region
        // Predicated region
        $region57: #{tpu_custom_call.1} parent=55 // pred_check
          %p331 = pneg %p40
        $region58: #{tpu_custom_call.1} parent=55 // pred_check_branch
          %333 = sbr.rel (%p331) target = $region60
        $region59: #{tpu_custom_call.1} parent=55 // pred_region
          %p334 = scmp.lt.s32.totalorder %s20, 1
          %s335 = scalar_select %p334, %s20, 1
          %s336 = smul.addr %s335, 8
          %s337 = scalar_lea.vmem %s0, %s336
        $region60: #{tpu_custom_call.1} parent=55 // pred_fallthru
          _
      $region56: #{tpu_custom_call.1} parent=5 // pred_fallthru
        _
      %p338 = scmp.le.s32.totalorder 1, %s20
      %p339 = scmp.lt.s32.totalorder %s20, 3
      %p340 = pnand %p338, %p339
      %p341 = pneg %p340
      // Predicated region
      $region61: #{tpu_custom_call.1} parent=5 // pred_check
        _
      $region62: #{tpu_custom_call.1} parent=5 // pred_check_branch
        %343 = sbr.rel (%p340) target = $region64
      $region63: #{tpu_custom_call.1} parent=5 // pred_region
        %s344 = ssub.s32 %s20, 1
        %p345 = scmp.lt.s32.totalorder %s25, 1
        %s346 = scalar_select %p345, %s25, 1
        %s347 = smul.addr %s346, 8
        %s348 = scalar_lea.vmem %s0, %s347
        %p349 = pneg %p46
        %p350 = pneg %p43
        %p351 = pneg %p67
        %p352 = pneg %p64
        %p353 = pneg %p88
        %p354 = pneg %p85
        %p355 = pneg %p109
        %p356 = pneg %p106
        %p357 = pneg %p130
        %p358 = pneg %p127
        %p359 = pneg %p151
        %p360 = pneg %p148
        %p361 = pneg %p172
        %p362 = pneg %p169
        %p363 = pneg %p193
        %p364 = pneg %p190
        %p365 = pneg %p214
        %p366 = pneg %p211
        %p367 = pneg %p235
        %p368 = pneg %p232
        %p369 = pneg %p256
        %p370 = pneg %p253
        %p371 = pneg %p282
        %p372 = pneg %p279
        %s373 = sand.u32 %s269, 1
        %s374 = scalar_lea.sflag [#allocation3], %s373
        %s375 = sand.u32 %s269, 1
        %s376 = smul.addr %s375, 8
        %s377 = scalar_lea.vmem [#allocation2], %s376
        %p378 = scmp.lt.s32.totalorder %s25, 1
        %s379 = scalar_select %p378, %s25, 1
        %s380 = smul.addr %s379, 8
        %s381 = scalar_lea.vmem %s0, %s380
        %v382 = vld [vmem:[%s381] sm:$0xff]
        %v383 = vld [vmem:[%s1] sm:$0xff]
        %v384 = vld [vmem:[%s1 + $0x8] sm:$0xff]
        %v385 = vld [vmem:[%s1 + $0x10] sm:$0xff]
        %v386 = vld [vmem:[%s1 + $0x18] sm:$0xff]
        %v387 = vld [vmem:[%s2] sm:$0x1]
        %v388 = vlaneseq
        %v389 = vshrl.u32 %v388, 7
        %v390 = vsub.s32 0, %v389
        %v391 = vrot.slane %v387, %v390
        %vm392 = vcmask 261120
        %v394 = vsel %vm392, %v382, 0
        %396 = vmatprep.subr.mxu0 0.0
        %397 = vmatpush1.msra.mxu0 %v383
        %398 = vmatprep.subr.mxu0 0.0
        %399 = vmatpush1.msra.mxu0 %v384
        %400 = vmatprep.subr.mxu0 0.0
        %401 = vmatpush1.msra.mxu0 %v385
        %402 = vmatprep.subr.mxu0 0.0
        %403 = vmatpush1.msra.mxu0 %v386
        %404 = vmatprep.subr.mxu0 0.0
        %405 = vmatpush1.msra.mxu0 0.0
        %406 = vmatprep.subr.mxu0 0.0
        %407 = vmatpush1.msra.mxu0 0.0
        %408 = vmatprep.subr.mxu0 0.0
        %409 = vmatpush1.msra.mxu0 0.0
        %410 = vmatprep.subr.mxu0 0.0
        %411 = vmatpush1.msra.mxu0 0.0
        %412 = vmatprep.subr.mxu0 0.0
        %413 = vmatpush1.msra.mxu0 0.0
        %414 = vmatprep.subr.mxu0 0.0
        %415 = vmatpush1.msra.mxu0 0.0
        %416 = vmatprep.subr.mxu0 0.0
        %417 = vmatpush1.msra.mxu0 0.0
        %418 = vmatprep.subr.mxu0 0.0
        %419 = vmatpush1.msra.mxu0 0.0
        %420 = vmatprep.subr.mxu0 0.0
        %421 = vmatpush1.msra.mxu0 0.0
        %422 = vmatprep.subr.mxu0 0.0
        %423 = vmatpush1.msra.mxu0 0.0
        %424 = vmatprep.subr.mxu0 0.0
        %425 = vmatpush1.msra.mxu0 0.0
        %426 = vmatprep.subr.mxu0 0.0
        %427 = vmatpush1.msra.mxu0 0.0
        %428 = vmatprep.subr.mxu0 0.0
        %429 = vmatpush1.msra.mxu0 0.0
        %430 = vmatprep.subr.mxu0 0.0
        %431 = vmatpush1.msra.mxu0 0.0
        %432 = vmatprep.subr.mxu0 0.0
        %433 = vmatpush1.msra.mxu0 0.0
        %434 = vmatprep.subr.mxu0 0.0
        %435 = vmatpush1.msra.mxu0 0.0
        %436 = vmatprep.subr.mxu0 0.0
        %437 = vmatpush1.msra.mxu0 0.0
        %438 = vmatprep.subr.mxu0 0.0
        %439 = vmatpush1.msra.mxu0 0.0
        %440 = vmatprep.subr.mxu0 0.0
        %441 = vmatpush1.msra.mxu0 0.0
        %442 = vmatprep.subr.mxu0 0.0
        %443 = vmatpush1.msra.mxu0 0.0
        %444 = vmatprep.subr.mxu0 0.0
        %445 = vmatpush1.msra.mxu0 0.0
        %446 = vmatprep.subr.mxu0 0.0
        %447 = vmatpush1.msra.mxu0 0.0
        %448 = vmatprep.subr.mxu0 0.0
        %449 = vmatpush1.msra.mxu0 0.0
        %450 = vmatprep.subr.mxu0 0.0
        %451 = vmatpush1.msra.mxu0 0.0
        %452 = vmatprep.subr.mxu0 0.0
        %453 = vmatpush1.msra.mxu0 0.0
        %454 = vmatprep.subr.mxu0 0.0
        %455 = vmatpush1.msra.mxu0 0.0
        %456 = vmatprep.subr.mxu0 0.0
        %457 = vmatpush1.msra.mxu0 0.0
        %458 = vmatprep.subr.mxu0 0.0
        %459 = vmatpush1.msra.mxu0 0.0
        %460 = vmatprep.mubr.f32.mxu0 0.0
        %461 = vmatmul.mubr.f32.gmra.mrb[0].mxu0 %v394
        %v462 = vpop.f32.mrb[0].mxu0
        %v463 = vadd.f32 %v391, %v462
        %v464 = vpop.f32.mrb[0].mxu0
        %465 = vdwg.mxu0
        %s466 = scalar_lea.vmem %s1, 32
        %v467 = vld [vmem:[%s466] sm:$0xff]
        %v468 = vld [vmem:[%s466 + $0x8] sm:$0xff]
        %v469 = vld [vmem:[%s466 + $0x10] sm:$0xff]
        %v470 = vld [vmem:[%s466 + $0x18] sm:$0xff]
        %v471 = vld [vmem:[%s2 + $0x1] sm:$0x1]
        %v472 = vlaneseq
        %v473 = vshrl.u32 %v472, 7
        %v474 = vsub.s32 0, %v473
        %v475 = vrot.slane %v471, %v474
        %476 = vmatprep.subr.mxu0 0.0
        %477 = vmatpush1.msra.mxu0 %v467
        %478 = vmatprep.subr.mxu0 0.0
        %479 = vmatpush1.msra.mxu0 %v468
        %480 = vmatprep.subr.mxu0 0.0
        %481 = vmatpush1.msra.mxu0 %v469
        %482 = vmatprep.subr.mxu0 0.0
        %483 = vmatpush1.msra.mxu0 %v470
        %484 = vmatprep.subr.mxu0 0.0
        %485 = vmatpush1.msra.mxu0 0.0
        %486 = vmatprep.subr.mxu0 0.0
        %487 = vmatpush1.msra.mxu0 0.0
        %488 = vmatprep.subr.mxu0 0.0
        %489 = vmatpush1.msra.mxu0 0.0
        %490 = vmatprep.subr.mxu0 0.0
        %491 = vmatpush1.msra.mxu0 0.0
        %492 = vmatprep.subr.mxu0 0.0
        %493 = vmatpush1.msra.mxu0 0.0
        %494 = vmatprep.subr.mxu0 0.0
        %495 = vmatpush1.msra.mxu0 0.0
        %496 = vmatprep.subr.mxu0 0.0
        %497 = vmatpush1.msra.mxu0 0.0
        %498 = vmatprep.subr.mxu0 0.0
        %499 = vmatpush1.msra.mxu0 0.0
        %500 = vmatprep.subr.mxu0 0.0
        %501 = vmatpush1.msra.mxu0 0.0
        %502 = vmatprep.subr.mxu0 0.0
        %503 = vmatpush1.msra.mxu0 0.0
        %504 = vmatprep.subr.mxu0 0.0
        %505 = vmatpush1.msra.mxu0 0.0
        %506 = vmatprep.subr.mxu0 0.0
        %507 = vmatpush1.msra.mxu0 0.0
        %508 = vmatprep.subr.mxu0 0.0
        %509 = vmatpush1.msra.mxu0 0.0
        %510 = vmatprep.subr.mxu0 0.0
        %511 = vmatpush1.msra.mxu0 0.0
        %512 = vmatprep.subr.mxu0 0.0
        %513 = vmatpush1.msra.mxu0 0.0
        %514 = vmatprep.subr.mxu0 0.0
        %515 = vmatpush1.msra.mxu0 0.0
        %516 = vmatprep.subr.mxu0 0.0
        %517 = vmatpush1.msra.mxu0 0.0
        %518 = vmatprep.subr.mxu0 0.0
        %519 = vmatpush1.msra.mxu0 0.0
        %520 = vmatprep.subr.mxu0 0.0
        %521 = vmatpush1.msra.mxu0 0.0
        %522 = vmatprep.subr.mxu0 0.0
        %523 = vmatpush1.msra.mxu0 0.0
        %524 = vmatprep.subr.mxu0 0.0
        %525 = vmatpush1.msra.mxu0 0.0
        %526 = vmatprep.subr.mxu0 0.0
        %527 = vmatpush1.msra.mxu0 0.0
        %528 = vmatprep.subr.mxu0 0.0
        %529 = vmatpush1.msra.mxu0 0.0
        %530 = vmatprep.subr.mxu0 0.0
        %531 = vmatpush1.msra.mxu0 0.0
        %532 = vmatprep.subr.mxu0 0.0
        %533 = vmatpush1.msra.mxu0 0.0
        %534 = vmatprep.subr.mxu0 0.0
        %535 = vmatpush1.msra.mxu0 0.0
        %536 = vmatprep.subr.mxu0 0.0
        %537 = vmatpush1.msra.mxu0 0.0
        %538 = vmatprep.subr.mxu0 0.0
        %539 = vmatpush1.msra.mxu0 0.0
        %540 = vmatprep.mubr.f32.mxu0 0.0
        %541 = vmatmul.mubr.f32.gmra.mrb[0].mxu0 %v394
        %v542 = vpop.f32.mrb[0].mxu0
        %v543 = vadd.f32 %v475, %v542
        %v544 = vpop.f32.mrb[0].mxu0
        %545 = vdwg.mxu0
        %s546 = scalar_lea.vmem %s1, 64
        %v547 = vld [vmem:[%s546] sm:$0xff]
        %v548 = vld [vmem:[%s546 + $0x8] sm:$0xff]
        %v549 = vld [vmem:[%s546 + $0x10] sm:$0xff]
        %v550 = vld [vmem:[%s546 + $0x18] sm:$0xff]
        %v551 = vld [vmem:[%s2 + $0x2] sm:$0x1]
        %v552 = vlaneseq
        %v553 = vshrl.u32 %v552, 7
        %v554 = vsub.s32 0, %v553
        %v555 = vrot.slane %v551, %v554
        %556 = vmatprep.subr.mxu0 0.0
        %557 = vmatpush1.msra.mxu0 %v547
        %558 = vmatprep.subr.mxu0 0.0
        %559 = vmatpush1.msra.mxu0 %v548
        %560 = vmatprep.subr.mxu0 0.0
        %561 = vmatpush1.msra.mxu0 %v549
        %562 = vmatprep.subr.mxu0 0.0
        %563 = vmatpush1.msra.mxu0 %v550
        %564 = vmatprep.subr.mxu0 0.0
        %565 = vmatpush1.msra.mxu0 0.0
        %566 = vmatprep.subr.mxu0 0.0
        %567 = vmatpush1.msra.mxu0 0.0
        %568 = vmatprep.subr.mxu0 0.0
        %569 = vmatpush1.msra.mxu0 0.0
        %570 = vmatprep.subr.mxu0 0.0
        %571 = vmatpush1.msra.mxu0 0.0
        %572 = vmatprep.subr.mxu0 0.0
        %573 = vmatpush1.msra.mxu0 0.0
        %574 = vmatprep.subr.mxu0 0.0
        %575 = vmatpush1.msra.mxu0 0.0
        %576 = vmatprep.subr.mxu0 0.0
        %577 = vmatpush1.msra.mxu0 0.0
        %578 = vmatprep.subr.mxu0 0.0
        %579 = vmatpush1.msra.mxu0 0.0
        %580 = vmatprep.subr.mxu0 0.0
        %581 = vmatpush1.msra.mxu0 0.0
        %582 = vmatprep.subr.mxu0 0.0
        %583 = vmatpush1.msra.mxu0 0.0
        %584 = vmatprep.subr.mxu0 0.0
        %585 = vmatpush1.msra.mxu0 0.0
        %586 = vmatprep.subr.mxu0 0.0
        %587 = vmatpush1.msra.mxu0 0.0
        %588 = vmatprep.subr.mxu0 0.0
        %589 = vmatpush1.msra.mxu0 0.0
        %590 = vmatprep.subr.mxu0 0.0
        %591 = vmatpush1.msra.mxu0 0.0
        %592 = vmatprep.subr.mxu0 0.0
        %593 = vmatpush1.msra.mxu0 0.0
        %594 = vmatprep.subr.mxu0 0.0
        %595 = vmatpush1.msra.mxu0 0.0
        %596 = vmatprep.subr.mxu0 0.0
        %597 = vmatpush1.msra.mxu0 0.0
        %598 = vmatprep.subr.mxu0 0.0
        %599 = vmatpush1.msra.mxu0 0.0
        %600 = vmatprep.subr.mxu0 0.0
        %601 = vmatpush1.msra.mxu0 0.0
        %602 = vmatprep.subr.mxu0 0.0
        %603 = vmatpush1.msra.mxu0 0.0
        %604 = vmatprep.subr.mxu0 0.0
        %605 = vmatpush1.msra.mxu0 0.0
        %606 = vmatprep.subr.mxu0 0.0
        %607 = vmatpush1.msra.mxu0 0.0
        %608 = vmatprep.subr.mxu0 0.0
        %609 = vmatpush1.msra.mxu0 0.0
        %610 = vmatprep.subr.mxu0 0.0
        %611 = vmatpush1.msra.mxu0 0.0
        %612 = vmatprep.subr.mxu0 0.0
        %613 = vmatpush1.msra.mxu0 0.0
        %614 = vmatprep.subr.mxu0 0.0
        %615 = vmatpush1.msra.mxu0 0.0
        %616 = vmatprep.subr.mxu0 0.0
        %617 = vmatpush1.msra.mxu0 0.0
        %618 = vmatprep.subr.mxu0 0.0
        %619 = vmatpush1.msra.mxu0 0.0
        %620 = vmatprep.mubr.f32.mxu0 0.0
        %621 = vmatmul.mubr.f32.gmra.mrb[0].mxu0 %v394
        %v622 = vpop.f32.mrb[0].mxu0
        %v623 = vadd.f32 %v555, %v622
        %v624 = vpop.f32.mrb[0].mxu0
        %625 = vdwg.mxu0
        %v627 = vsel %vm392, %v463, 0
        %v630 = vsel %vm392, %v543, 0
        %632 = vmatprep.subr.mxu0 0.0
        %633 = vmatpush1.xpose.msra.mxu0 %v630
        %634 = vmatprep.subr.mxu0 0.0
        %635 = vmatpush1.xpose.msra.mxu0 0.0
        %636 = vmatprep.subr.mxu0 0.0
        %637 = vmatpush1.xpose.msra.mxu0 0.0
        %638 = vmatprep.subr.mxu0 0.0
        %639 = vmatpush1.xpose.msra.mxu0 0.0
        %640 = vmatprep.subr.mxu0 0.0
        %641 = vmatpush1.xpose.msra.mxu0 0.0
        %642 = vmatprep.subr.mxu0 0.0
        %643 = vmatpush1.xpose.msra.mxu0 0.0
        %644 = vmatprep.subr.mxu0 0.0
        %645 = vmatpush1.xpose.msra.mxu0 0.0
        %646 = vmatprep.subr.mxu0 0.0
        %647 = vmatpush1.xpose.msra.mxu0 0.0
        %648 = vmatprep.subr.mxu0 0.0
        %649 = vmatpush1.xpose.msra.mxu0 0.0
        %650 = vmatprep.subr.mxu0 0.0
        %651 = vmatpush1.xpose.msra.mxu0 0.0
        %652 = vmatprep.subr.mxu0 0.0
        %653 = vmatpush1.xpose.msra.mxu0 0.0
        %654 = vmatprep.subr.mxu0 0.0
        %655 = vmatpush1.xpose.msra.mxu0 0.0
        %656 = vmatprep.subr.mxu0 0.0
        %657 = vmatpush1.xpose.msra.mxu0 0.0
        %658 = vmatprep.subr.mxu0 0.0
        %659 = vmatpush1.xpose.msra.mxu0 0.0
        %660 = vmatprep.subr.mxu0 0.0
        %661 = vmatpush1.xpose.msra.mxu0 0.0
        %662 = vmatprep.subr.mxu0 0.0
        %663 = vmatpush1.xpose.msra.mxu0 0.0
        %664 = vmatprep.subr.mxu0 0.0
        %665 = vmatpush1.xpose.msra.mxu0 0.0
        %666 = vmatprep.subr.mxu0 0.0
        %667 = vmatpush1.xpose.msra.mxu0 0.0
        %668 = vmatprep.subr.mxu0 0.0
        %669 = vmatpush1.xpose.msra.mxu0 0.0
        %670 = vmatprep.subr.mxu0 0.0
        %671 = vmatpush1.xpose.msra.mxu0 0.0
        %672 = vmatprep.subr.mxu0 0.0
        %673 = vmatpush1.xpose.msra.mxu0 0.0
        %674 = vmatprep.subr.mxu0 0.0
        %675 = vmatpush1.xpose.msra.mxu0 0.0
        %676 = vmatprep.subr.mxu0 0.0
        %677 = vmatpush1.xpose.msra.mxu0 0.0
        %678 = vmatprep.subr.mxu0 0.0
        %679 = vmatpush1.xpose.msra.mxu0 0.0
        %680 = vmatprep.subr.mxu0 0.0
        %681 = vmatpush1.xpose.msra.mxu0 0.0
        %682 = vmatprep.subr.mxu0 0.0
        %683 = vmatpush1.xpose.msra.mxu0 0.0
        %684 = vmatprep.subr.mxu0 0.0
        %685 = vmatpush1.xpose.msra.mxu0 0.0
        %686 = vmatprep.subr.mxu0 0.0
        %687 = vmatpush1.xpose.msra.mxu0 0.0
        %688 = vmatprep.subr.mxu0 0.0
        %689 = vmatpush1.xpose.msra.mxu0 0.0
        %690 = vmatprep.subr.mxu0 0.0
        %691 = vmatpush1.xpose.msra.mxu0 0.0
        %692 = vmatprep.subr.mxu0 0.0
        %693 = vmatpush1.xpose.msra.mxu0 0.0
        %694 = vmatprep.subr.mxu0 0.0
        %695 = vmatpush1.xpose.msra.mxu0 0.0
        %696 = vmatprep.mubr.f32.mxu0 0.0
        %697 = vmatmul.mubr.f32.gmra.mrb[0].mxu0 %v627
        %v698 = vpop.f32.mrb[0].mxu0
        %v699 = vadd.f32 0.0, %v698
        %v700 = vpop.f32.mrb[0].mxu0
        %701 = vdwg.mxu0
        %vm702 = vcmask 64512
        %v703 = vsel %vm702, %v699, -inf
        %704 = vmax.xlane.f32.xlu0 %v703
        %v705 = vpop.xlane.xlu0 %704
        %v706 = vsub.f32 %v699, %v705
        %v707 = vmul.f32 %v706, 1.442695
        %v708 = vpow.pop %v707
        %v709 = vsel %vm702, %v708, 0.0
        %710 = vadd.xlane.f32.xlu0 %v709
        %v711 = vpop.xlane.xlu0 %710
        %v712 = vrcp.pop %v711
        %v713 = vmul.f32 %v708, %v712
        %v715 = vsel %vm702, %v713, 0
        %717 = vmatprep.subr.mxu0 0.0
        %718 = vmatpush1.msra.mxu0 %v623
        %719 = vmatprep.subr.mxu0 0.0
        %720 = vmatpush1.msra.mxu0 0.0
        %721 = vmatprep.subr.mxu0 0.0
        %722 = vmatpush1.msra.mxu0 0.0
        %723 = vmatprep.subr.mxu0 0.0
        %724 = vmatpush1.msra.mxu0 0.0
        %725 = vmatprep.subr.mxu0 0.0
        %726 = vmatpush1.msra.mxu0 0.0
        %727 = vmatprep.subr.mxu0 0.0
        %728 = vmatpush1.msra.mxu0 0.0
        %729 = vmatprep.subr.mxu0 0.0
        %730 = vmatpush1.msra.mxu0 0.0
        %731 = vmatprep.subr.mxu0 0.0
        %732 = vmatpush1.msra.mxu0 0.0
        %733 = vmatprep.subr.mxu0 0.0
        %734 = vmatpush1.msra.mxu0 0.0
        %735 = vmatprep.subr.mxu0 0.0
        %736 = vmatpush1.msra.mxu0 0.0
        %737 = vmatprep.subr.mxu0 0.0
        %738 = vmatpush1.msra.mxu0 0.0
        %739 = vmatprep.subr.mxu0 0.0
        %740 = vmatpush1.msra.mxu0 0.0
        %741 = vmatprep.subr.mxu0 0.0
        %742 = vmatpush1.msra.mxu0 0.0
        %743 = vmatprep.subr.mxu0 0.0
        %744 = vmatpush1.msra.mxu0 0.0
        %745 = vmatprep.subr.mxu0 0.0
        %746 = vmatpush1.msra.mxu0 0.0
        %747 = vmatprep.subr.mxu0 0.0
        %748 = vmatpush1.msra.mxu0 0.0
        %749 = vmatprep.subr.mxu0 0.0
        %750 = vmatpush1.msra.mxu0 0.0
        %751 = vmatprep.subr.mxu0 0.0
        %752 = vmatpush1.msra.mxu0 0.0
        %753 = vmatprep.subr.mxu0 0.0
        %754 = vmatpush1.msra.mxu0 0.0
        %755 = vmatprep.subr.mxu0 0.0
        %756 = vmatpush1.msra.mxu0 0.0
        %757 = vmatprep.subr.mxu0 0.0
        %758 = vmatpush1.msra.mxu0 0.0
        %759 = vmatprep.subr.mxu0 0.0
        %760 = vmatpush1.msra.mxu0 0.0
        %761 = vmatprep.subr.mxu0 0.0
        %762 = vmatpush1.msra.mxu0 0.0
        %763 = vmatprep.subr.mxu0 0.0
        %764 = vmatpush1.msra.mxu0 0.0
        %765 = vmatprep.subr.mxu0 0.0
        %766 = vmatpush1.msra.mxu0 0.0
        %767 = vmatprep.subr.mxu0 0.0
        %768 = vmatpush1.msra.mxu0 0.0
        %769 = vmatprep.subr.mxu0 0.0
        %770 = vmatpush1.msra.mxu0 0.0
        %771 = vmatprep.subr.mxu0 0.0
        %772 = vmatpush1.msra.mxu0 0.0
        %773 = vmatprep.subr.mxu0 0.0
        %774 = vmatpush1.msra.mxu0 0.0
        %775 = vmatprep.subr.mxu0 0.0
        %776 = vmatpush1.msra.mxu0 0.0
        %777 = vmatprep.subr.mxu0 0.0
        %778 = vmatpush1.msra.mxu0 0.0
        %779 = vmatprep.subr.mxu0 0.0
        %780 = vmatpush1.msra.mxu0 0.0
        %781 = vmatprep.mubr.f32.mxu0 0.0
        %782 = vmatmul.mubr.f32.gmra.mrb[0].mxu0 %v715
        %v783 = vpop.f32.mrb[0].mxu0
        %v784 = vadd.f32 0.0, %v783
        %v785 = vpop.f32.mrb[0].mxu0
        %786 = vdwg.mxu0
        %v787 = vadd.f32 %v382, %v784
        %v788 = vsel %vm392, %v787, 0.0
        %789 = vadd.xlane.f32.xlu0 %v788
        %v790 = vpop.xlane.xlu0 %789
        %v791 = vrcp.pop 32.0
        %v792 = vmul.f32 %v790, %v791
        %v793 = vsub.f32 %v787, %v792
        %v794 = vmul.f32 %v793, %v793
        %v795 = vsel %vm392, %v794, 0.0
        %796 = vadd.xlane.f32.xlu0 %v795
        %v797 = vpop.xlane.xlu0 %796
        %v798 = vmul.f32 %v797, %v791
        %v799 = vadd.f32 %v798, 1e-05
        %v800 = vrsqrt.pop %v799
        %v801 = vmul.f32 %v793, %v800
        %v802 = vld [vmem:[%s5] sm:$0x1]
        %v803 = vlaneseq
        %v804 = vshrl.u32 %v803, 7
        %v805 = vsub.s32 0, %v804
        %v806 = vrot.slane %v802, %v805
        %v807 = vmul.f32 %v801, %v806
        %v808 = vld [vmem:[%s5 + $0x1] sm:$0x1]
        %v809 = vlaneseq
        %v810 = vshrl.u32 %v809, 7
        %v811 = vsub.s32 0, %v810
        %v812 = vrot.slane %v808, %v811
        %v813 = vadd.f32 %v807, %v812
        %v814 = vld [vmem:[%s3] sm:$0xff]
        %v815 = vld [vmem:[%s3 + $0x8] sm:$0xff]
        %v816 = vld [vmem:[%s3 + $0x10] sm:$0xff]
        %v817 = vld [vmem:[%s3 + $0x18] sm:$0xff]
        %v818 = vld [vmem:[%s4] sm:$0x1]
        %v820 = vlaneseq
        %v821 = vshrl.u32 %v820, 7
        %v822 = vsub.s32 0, %v821
        %v823 = vrot.slane %v818, %v822
        %v826 = vsel %vm392, %v813, 0
        %828 = vmatprep.subr.mxu0 0.0
        %829 = vmatpush1.msra.mxu0 %v814
        %830 = vmatprep.subr.mxu0 0.0
        %831 = vmatpush1.msra.mxu0 %v815
        %832 = vmatprep.subr.mxu0 0.0
        %833 = vmatpush1.msra.mxu0 %v816
        %834 = vmatprep.subr.mxu0 0.0
        %835 = vmatpush1.msra.mxu0 %v817
        %836 = vmatprep.subr.mxu0 0.0
        %837 = vmatpush1.msra.mxu0 0.0
        %838 = vmatprep.subr.mxu0 0.0
        %839 = vmatpush1.msra.mxu0 0.0
        %840 = vmatprep.subr.mxu0 0.0
        %841 = vmatpush1.msra.mxu0 0.0
        %842 = vmatprep.subr.mxu0 0.0
        %843 = vmatpush1.msra.mxu0 0.0
        %844 = vmatprep.subr.mxu0 0.0
        %845 = vmatpush1.msra.mxu0 0.0
        %846 = vmatprep.subr.mxu0 0.0
        %847 = vmatpush1.msra.mxu0 0.0
        %848 = vmatprep.subr.mxu0 0.0
        %849 = vmatpush1.msra.mxu0 0.0
        %850 = vmatprep.subr.mxu0 0.0
        %851 = vmatpush1.msra.mxu0 0.0
        %852 = vmatprep.subr.mxu0 0.0
        %853 = vmatpush1.msra.mxu0 0.0
        %854 = vmatprep.subr.mxu0 0.0
        %855 = vmatpush1.msra.mxu0 0.0
        %856 = vmatprep.subr.mxu0 0.0
        %857 = vmatpush1.msra.mxu0 0.0
        %858 = vmatprep.subr.mxu0 0.0
        %859 = vmatpush1.msra.mxu0 0.0
        %860 = vmatprep.subr.mxu0 0.0
        %861 = vmatpush1.msra.mxu0 0.0
        %862 = vmatprep.subr.mxu0 0.0
        %863 = vmatpush1.msra.mxu0 0.0
        %864 = vmatprep.subr.mxu0 0.0
        %865 = vmatpush1.msra.mxu0 0.0
        %866 = vmatprep.subr.mxu0 0.0
        %867 = vmatpush1.msra.mxu0 0.0
        %868 = vmatprep.subr.mxu0 0.0
        %869 = vmatpush1.msra.mxu0 0.0
        %870 = vmatprep.subr.mxu0 0.0
        %871 = vmatpush1.msra.mxu0 0.0
        %872 = vmatprep.subr.mxu0 0.0
        %873 = vmatpush1.msra.mxu0 0.0
        %874 = vmatprep.subr.mxu0 0.0
        %875 = vmatpush1.msra.mxu0 0.0
        %876 = vmatprep.subr.mxu0 0.0
        %877 = vmatpush1.msra.mxu0 0.0
        %878 = vmatprep.subr.mxu0 0.0
        %879 = vmatpush1.msra.mxu0 0.0
        %880 = vmatprep.subr.mxu0 0.0
        %881 = vmatpush1.msra.mxu0 0.0
        %882 = vmatprep.subr.mxu0 0.0
        %883 = vmatpush1.msra.mxu0 0.0
        %884 = vmatprep.subr.mxu0 0.0
        %885 = vmatpush1.msra.mxu0 0.0
        %886 = vmatprep.subr.mxu0 0.0
        %887 = vmatpush1.msra.mxu0 0.0
        %888 = vmatprep.subr.mxu0 0.0
        %889 = vmatpush1.msra.mxu0 0.0
        %890 = vmatprep.subr.mxu0 0.0
        %891 = vmatpush1.msra.mxu0 0.0
        %892 = vmatprep.mubr.f32.mxu0 0.0
        %893 = vmatmul.mubr.f32.gmra.mrb[0].mxu0 %v826
        %v894 = vpop.f32.mrb[0].mxu0
        %v895 = vadd.f32 %v823, %v894
        %v896 = vpop.f32.mrb[0].mxu0
        %897 = vdwg.mxu0
        %v898 = vld [vmem:[%s6] sm:$0xff]
        %v899 = vld [vmem:[%s6 + $0x8] sm:$0xff]
        %v900 = vld [vmem:[%s6 + $0x10] sm:$0xff]
        %v901 = vld [vmem:[%s6 + $0x18] sm:$0xff]
        %v902 = vld [vmem:[%s6 + $0x20] sm:$0xff]
        %v903 = vld [vmem:[%s6 + $0x28] sm:$0xff]
        %v904 = vld [vmem:[%s6 + $0x30] sm:$0xff]
        %v905 = vld [vmem:[%s6 + $0x38] sm:$0xff]
        %v906 = vld [vmem:[%s6 + $0x40] sm:$0xff]
        %v907 = vld [vmem:[%s6 + $0x48] sm:$0xff]
        %v908 = vld [vmem:[%s6 + $0x50] sm:$0xff]
        %v909 = vld [vmem:[%s6 + $0x58] sm:$0xff]
        %v910 = vld [vmem:[%s6 + $0x60] sm:$0xff]
        %v911 = vld [vmem:[%s6 + $0x68] sm:$0xff]
        %v912 = vld [vmem:[%s6 + $0x70] sm:$0xff]
        %v913 = vld [vmem:[%s6 + $0x78] sm:$0xff]
        %v914 = vld [vmem:[%s6 + $0x80] sm:$0xff]
        %v915 = vld [vmem:[%s6 + $0x88] sm:$0xff]
        %v916 = vld [vmem:[%s6 + $0x90] sm:$0xff]
        %v917 = vld [vmem:[%s6 + $0x98] sm:$0xff]
        %v918 = vld [vmem:[%s6 + $0xa0] sm:$0xff]
        %v919 = vld [vmem:[%s6 + $0xa8] sm:$0xff]
        %v920 = vld [vmem:[%s6 + $0xb0] sm:$0xff]
        %v921 = vld [vmem:[%s6 + $0xb8] sm:$0xff]
        %v922 = vld [vmem:[%s6 + $0xc0] sm:$0xff]
        %v923 = vld [vmem:[%s6 + $0xc8] sm:$0xff]
        %v924 = vld [vmem:[%s6 + $0xd0] sm:$0xff]
        %v925 = vld [vmem:[%s6 + $0xd8] sm:$0xff]
        %v926 = vld [vmem:[%s6 + $0xe0] sm:$0xff]
        %v927 = vld [vmem:[%s6 + $0xe8] sm:$0xff]
        %v928 = vld [vmem:[%s6 + $0xf0] sm:$0xff]
        %v929 = vld [vmem:[%s6 + $0xf8] sm:$0xff]
        %v930 = vld [vmem:[%s6 + $0x100] sm:$0xff]
        %v931 = vld [vmem:[%s6 + $0x108] sm:$0xff]
        %v932 = vld [vmem:[%s6 + $0x110] sm:$0xff]
        %v933 = vld [vmem:[%s6 + $0x118] sm:$0xff]
        %v934 = vld [vmem:[%s6 + $0x120] sm:$0xff]
        %v935 = vld [vmem:[%s6 + $0x128] sm:$0xff]
        %v936 = vld [vmem:[%s6 + $0x130] sm:$0xff]
        %v937 = vld [vmem:[%s6 + $0x138] sm:$0xff]
        %v938 = vld [vmem:[%s6 + $0x140] sm:$0xff]
        %v939 = vld [vmem:[%s6 + $0x148] sm:$0xff]
        %v940 = vld [vmem:[%s6 + $0x150] sm:$0xff]
        %v941 = vld [vmem:[%s6 + $0x158] sm:$0xff]
        %v942 = vld [vmem:[%s6 + $0x160] sm:$0xff]
        %v943 = vld [vmem:[%s6 + $0x168] sm:$0xff]
        %v944 = vld [vmem:[%s6 + $0x170] sm:$0xff]
        %v945 = vld [vmem:[%s6 + $0x178] sm:$0xff]
        %v946 = vld [vmem:[%s6 + $0x180] sm:$0xff]
        %v947 = vld [vmem:[%s6 + $0x188] sm:$0xff]
        %v948 = vld [vmem:[%s6 + $0x190] sm:$0xff]
        %v949 = vld [vmem:[%s6 + $0x198] sm:$0xff]
        %v950 = vld [vmem:[%s6 + $0x1a0] sm:$0xff]
        %v951 = vld [vmem:[%s6 + $0x1a8] sm:$0xff]
        %v952 = vld [vmem:[%s6 + $0x1b0] sm:$0xff]
        %v953 = vld [vmem:[%s6 + $0x1b8] sm:$0xff]
        %v954 = vld [vmem:[%s6 + $0x1c0] sm:$0xff]
        %v955 = vld [vmem:[%s6 + $0x1c8] sm:$0xff]
        %v956 = vld [vmem:[%s6 + $0x1d0] sm:$0xff]
        %v957 = vld [vmem:[%s6 + $0x1d8] sm:$0xff]
        %v958 = vld [vmem:[%s6 + $0x1e0] sm:$0xff]
        %v959 = vld [vmem:[%s6 + $0x1e8] sm:$0xff]
        %v960 = vld [vmem:[%s6 + $0x1f0] sm:$0xff]
        %v961 = vld [vmem:[%s6 + $0x1f8] sm:$0xff]
        %v962 = vld [vmem:[%s7] sm:$0xff]
        %v963 = vld [vmem:[%s7 + $0x8] sm:$0xff]
        %v966 = vlaneseq
        %v967 = vshrl.u32 %v966, 7
        %v968 = vsub.s32 0, %v967
        %v969 = vrot.slane %v962, %v968
        %v970 = vlaneseq
        %v971 = vshrl.u32 %v970, 7
        %v972 = vsub.s32 1, %v971
        %v973 = vrot.slane %v962, %v972
        %v974 = vlaneseq
        %v975 = vshrl.u32 %v974, 7
        %v976 = vsub.s32 2, %v975
        %v977 = vrot.slane %v962, %v976
        %v978 = vlaneseq
        %v979 = vshrl.u32 %v978, 7
        %v980 = vsub.s32 3, %v979
        %v981 = vrot.slane %v962, %v980
        %v982 = vlaneseq
        %v983 = vshrl.u32 %v982, 7
        %v984 = vsub.s32 4, %v983
        %v985 = vrot.slane %v962, %v984
        %v986 = vlaneseq
        %v987 = vshrl.u32 %v986, 7
        %v988 = vsub.s32 5, %v987
        %v989 = vrot.slane %v962, %v988
        %v990 = vlaneseq
        %v991 = vshrl.u32 %v990, 7
        %v992 = vsub.s32 6, %v991
        %v993 = vrot.slane %v962, %v992
        %v994 = vlaneseq
        %v995 = vshrl.u32 %v994, 7
        %v996 = vsub.s32 7, %v995
        %v997 = vrot.slane %v962, %v996
        %v998 = vlaneseq
        %v999 = vshrl.u32 %v998, 7
        %v1000 = vsub.s32 0, %v999
        %v1001 = vrot.slane %v963, %v1000
        %v1002 = vlaneseq
        %v1003 = vshrl.u32 %v1002, 7
        %v1004 = vsub.s32 1, %v1003
        %v1005 = vrot.slane %v963, %v1004
        %v1006 = vlaneseq
        %v1007 = vshrl.u32 %v1006, 7
        %v1008 = vsub.s32 2, %v1007
        %v1009 = vrot.slane %v963, %v1008
        %v1010 = vlaneseq
        %v1011 = vshrl.u32 %v1010, 7
        %v1012 = vsub.s32 3, %v1011
        %v1013 = vrot.slane %v963, %v1012
        %v1014 = vlaneseq
        %v1015 = vshrl.u32 %v1014, 7
        %v1016 = vsub.s32 4, %v1015
        %v1017 = vrot.slane %v963, %v1016
        %v1018 = vlaneseq
        %v1019 = vshrl.u32 %v1018, 7
        %v1020 = vsub.s32 5, %v1019
        %v1021 = vrot.slane %v963, %v1020
        %v1022 = vlaneseq
        %v1023 = vshrl.u32 %v1022, 7
        %v1024 = vsub.s32 6, %v1023
        %v1025 = vrot.slane %v963, %v1024
        %v1026 = vlaneseq
        %v1027 = vshrl.u32 %v1026, 7
        %v1028 = vsub.s32 7, %v1027
        %v1029 = vrot.slane %v963, %v1028
        %v1047 = vsel %vm392, %v895, 0
        %1049 = vmatprep.subr.mxu0 %v899
        %1050 = vmatpush1.msra.mxu0 %v898
        %1051 = vmatprep.subr.mxu0 %v915
        %1052 = vmatpush1.msra.mxu0 %v914
        %1053 = vmatprep.subr.mxu0 %v931
        %1054 = vmatpush1.msra.mxu0 %v930
        %1055 = vmatprep.subr.mxu0 %v947
        %1056 = vmatpush1.msra.mxu0 %v946
        %1057 = vmatprep.subr.mxu0 0.0
        %1058 = vmatpush1.msra.mxu0 0.0
        %1059 = vmatprep.subr.mxu0 0.0
        %1060 = vmatpush1.msra.mxu0 0.0
        %1061 = vmatprep.subr.mxu0 0.0
        %1062 = vmatpush1.msra.mxu0 0.0
        %1063 = vmatprep.subr.mxu0 0.0
        %1064 = vmatpush1.msra.mxu0 0.0
        %1065 = vmatprep.subr.mxu0 0.0
        %1066 = vmatpush1.msra.mxu0 0.0
        %1067 = vmatprep.subr.mxu0 0.0
        %1068 = vmatpush1.msra.mxu0 0.0
        %1069 = vmatprep.subr.mxu0 0.0
        %1070 = vmatpush1.msra.mxu0 0.0
        %1071 = vmatprep.subr.mxu0 0.0
        %1072 = vmatpush1.msra.mxu0 0.0
        %1073 = vmatprep.subr.mxu0 0.0
        %1074 = vmatpush1.msra.mxu0 0.0
        %1075 = vmatprep.subr.mxu0 0.0
        %1076 = vmatpush1.msra.mxu0 0.0
        %1077 = vmatprep.subr.mxu0 0.0
        %1078 = vmatpush1.msra.mxu0 0.0
        %1079 = vmatprep.subr.mxu0 0.0
        %1080 = vmatpush1.msra.mxu0 0.0
        %1081 = vmatprep.subr.mxu0 0.0
        %1082 = vmatpush1.msra.mxu0 0.0
        %1083 = vmatprep.subr.mxu0 0.0
        %1084 = vmatpush1.msra.mxu0 0.0
        %1085 = vmatprep.subr.mxu0 0.0
        %1086 = vmatpush1.msra.mxu0 0.0
        %1087 = vmatprep.subr.mxu0 0.0
        %1088 = vmatpush1.msra.mxu0 0.0
        %1089 = vmatprep.subr.mxu0 0.0
        %1090 = vmatpush1.msra.mxu0 0.0
        %1091 = vmatprep.subr.mxu0 0.0
        %1092 = vmatpush1.msra.mxu0 0.0
        %1093 = vmatprep.subr.mxu0 0.0
        %1094 = vmatpush1.msra.mxu0 0.0
        %1095 = vmatprep.subr.mxu0 0.0
        %1096 = vmatpush1.msra.mxu0 0.0
        %1097 = vmatprep.subr.mxu0 0.0
        %1098 = vmatpush1.msra.mxu0 0.0
        %1099 = vmatprep.subr.mxu0 0.0
        %1100 = vmatpush1.msra.mxu0 0.0
        %1101 = vmatprep.subr.mxu0 0.0
        %1102 = vmatpush1.msra.mxu0 0.0
        %1103 = vmatprep.subr.mxu0 0.0
        %1104 = vmatpush1.msra.mxu0 0.0
        %1105 = vmatprep.subr.mxu0 0.0
        %1106 = vmatpush1.msra.mxu0 0.0
        %1107 = vmatprep.subr.mxu0 0.0
        %1108 = vmatpush1.msra.mxu0 0.0
        %1109 = vmatprep.subr.mxu0 0.0
        %1110 = vmatpush1.msra.mxu0 0.0
        %1111 = vmatprep.subr.mxu0 0.0
        %1112 = vmatpush1.msra.mxu0 0.0
        %1113 = vmatprep.mubr.f32.mxu0 0.0
        %1114 = vmatmul.mubr.f32.gmra.mrb[0].mxu0 %v1047
        %v1115 = vpop.f32.mrb[0].mxu0
        %v1116 = vadd.f32 %v969, %v1115
        %v1117 = vpop.f32.mrb[0].mxu0
        %v1118 = vadd.f32 %v973, %v1117
        %1119 = vdwg.mxu0
        %1120 = vmatprep.subr.mxu0 %v901
        %1121 = vmatpush1.msra.mxu0 %v900
        %1122 = vmatprep.subr.mxu0 %v917
        %1123 = vmatpush1.msra.mxu0 %v916
        %1124 = vmatprep.subr.mxu0 %v933
        %1125 = vmatpush1.msra.mxu0 %v932
        %1126 = vmatprep.subr.mxu0 %v949
        %1127 = vmatpush1.msra.mxu0 %v948
        %1128 = vmatprep.subr.mxu0 0.0
        %1129 = vmatpush1.msra.mxu0 0.0
        %1130 = vmatprep.subr.mxu0 0.0
        %1131 = vmatpush1.msra.mxu0 0.0
        %1132 = vmatprep.subr.mxu0 0.0
        %1133 = vmatpush1.msra.mxu0 0.0
        %1134 = vmatprep.subr.mxu0 0.0
        %1135 = vmatpush1.msra.mxu0 0.0
        %1136 = vmatprep.subr.mxu0 0.0
        %1137 = vmatpush1.msra.mxu0 0.0
        %1138 = vmatprep.subr.mxu0 0.0
        %1139 = vmatpush1.msra.mxu0 0.0
        %1140 = vmatprep.subr.mxu0 0.0
        %1141 = vmatpush1.msra.mxu0 0.0
        %1142 = vmatprep.subr.mxu0 0.0
        %1143 = vmatpush1.msra.mxu0 0.0
        %1144 = vmatprep.subr.mxu0 0.0
        %1145 = vmatpush1.msra.mxu0 0.0
        %1146 = vmatprep.subr.mxu0 0.0
        %1147 = vmatpush1.msra.mxu0 0.0
        %1148 = vmatprep.subr.mxu0 0.0
        %1149 = vmatpush1.msra.mxu0 0.0
        %1150 = vmatprep.subr.mxu0 0.0
        %1151 = vmatpush1.msra.mxu0 0.0
        %1152 = vmatprep.subr.mxu0 0.0
        %1153 = vmatpush1.msra.mxu0 0.0
        %1154 = vmatprep.subr.mxu0 0.0
        %1155 = vmatpush1.msra.mxu0 0.0
        %1156 = vmatprep.subr.mxu0 0.0
        %1157 = vmatpush1.msra.mxu0 0.0
        %1158 = vmatprep.subr.mxu0 0.0
        %1159 = vmatpush1.msra.mxu0 0.0
        %1160 = vmatprep.subr.mxu0 0.0
        %1161 = vmatpush1.msra.mxu0 0.0
        %1162 = vmatprep.subr.mxu0 0.0
        %1163 = vmatpush1.msra.mxu0 0.0
        %1164 = vmatprep.subr.mxu0 0.0
        %1165 = vmatpush1.msra.mxu0 0.0
        %1166 = vmatprep.subr.mxu0 0.0
        %1167 = vmatpush1.msra.mxu0 0.0
        %1168 = vmatprep.subr.mxu0 0.0
        %1169 = vmatpush1.msra.mxu0 0.0
        %1170 = vmatprep.subr.mxu0 0.0
        %1171 = vmatpush1.msra.mxu0 0.0
        %1172 = vmatprep.subr.mxu0 0.0
        %1173 = vmatpush1.msra.mxu0 0.0
        %1174 = vmatprep.subr.mxu0 0.0
        %1175 = vmatpush1.msra.mxu0 0.0
        %1176 = vmatprep.subr.mxu0 0.0
        %1177 = vmatpush1.msra.mxu0 0.0
        %1178 = vmatprep.subr.mxu0 0.0
        %1179 = vmatpush1.msra.mxu0 0.0
        %1180 = vmatprep.subr.mxu0 0.0
        %1181 = vmatpush1.msra.mxu0 0.0
        %1182 = vmatprep.subr.mxu0 0.0
        %1183 = vmatpush1.msra.mxu0 0.0
        %1184 = vmatprep.mubr.f32.mxu0 0.0
        %1185 = vmatmul.mubr.f32.gmra.mrb[0].mxu0 %v1047
        %v1186 = vpop.f32.mrb[0].mxu0
        %v1187 = vadd.f32 %v977, %v1186
        %v1188 = vpop.f32.mrb[0].mxu0
        %v1189 = vadd.f32 %v981, %v1188
        %1190 = vdwg.mxu0
        %1191 = vmatprep.subr.mxu0 %v903
        %1192 = vmatpush1.msra.mxu0 %v902
        %1193 = vmatprep.subr.mxu0 %v919
        %1194 = vmatpush1.msra.mxu0 %v918
        %1195 = vmatprep.subr.mxu0 %v935
        %1196 = vmatpush1.msra.mxu0 %v934
        %1197 = vmatprep.subr.mxu0 %v951
        %1198 = vmatpush1.msra.mxu0 %v950
        %1199 = vmatprep.subr.mxu0 0.0
        %1200 = vmatpush1.msra.mxu0 0.0
        %1201 = vmatprep.subr.mxu0 0.0
        %1202 = vmatpush1.msra.mxu0 0.0
        %1203 = vmatprep.subr.mxu0 0.0
        %1204 = vmatpush1.msra.mxu0 0.0
        %1205 = vmatprep.subr.mxu0 0.0
        %1206 = vmatpush1.msra.mxu0 0.0
        %1207 = vmatprep.subr.mxu0 0.0
        %1208 = vmatpush1.msra.mxu0 0.0
        %1209 = vmatprep.subr.mxu0 0.0
        %1210 = vmatpush1.msra.mxu0 0.0
        %1211 = vmatprep.subr.mxu0 0.0
        %1212 = vmatpush1.msra.mxu0 0.0
        %1213 = vmatprep.subr.mxu0 0.0
        %1214 = vmatpush1.msra.mxu0 0.0
        %1215 = vmatprep.subr.mxu0 0.0
        %1216 = vmatpush1.msra.mxu0 0.0
        %1217 = vmatprep.subr.mxu0 0.0
        %1218 = vmatpush1.msra.mxu0 0.0
        %1219 = vmatprep.subr.mxu0 0.0
        %1220 = vmatpush1.msra.mxu0 0.0
        %1221 = vmatprep.subr.mxu0 0.0
        %1222 = vmatpush1.msra.mxu0 0.0
        %1223 = vmatprep.subr.mxu0 0.0
        %1224 = vmatpush1.msra.mxu0 0.0
        %1225 = vmatprep.subr.mxu0 0.0
        %1226 = vmatpush1.msra.mxu0 0.0
        %1227 = vmatprep.subr.mxu0 0.0
        %1228 = vmatpush1.msra.mxu0 0.0
        %1229 = vmatprep.subr.mxu0 0.0
        %1230 = vmatpush1.msra.mxu0 0.0
        %1231 = vmatprep.subr.mxu0 0.0
        %1232 = vmatpush1.msra.mxu0 0.0
        %1233 = vmatprep.subr.mxu0 0.0
        %1234 = vmatpush1.msra.mxu0 0.0
        %1235 = vmatprep.subr.mxu0 0.0
        %1236 = vmatpush1.msra.mxu0 0.0
        %1237 = vmatprep.subr.mxu0 0.0
        %1238 = vmatpush1.msra.mxu0 0.0
        %1239 = vmatprep.subr.mxu0 0.0
        %1240 = vmatpush1.msra.mxu0 0.0
        %1241 = vmatprep.subr.mxu0 0.0
        %1242 = vmatpush1.msra.mxu0 0.0
        %1243 = vmatprep.subr.mxu0 0.0
        %1244 = vmatpush1.msra.mxu0 0.0
        %1245 = vmatprep.subr.mxu0 0.0
        %1246 = vmatpush1.msra.mxu0 0.0
        %1247 = vmatprep.subr.mxu0 0.0
        %1248 = vmatpush1.msra.mxu0 0.0
        %1249 = vmatprep.subr.mxu0 0.0
        %1250 = vmatpush1.msra.mxu0 0.0
        %1251 = vmatprep.subr.mxu0 0.0
        %1252 = vmatpush1.msra.mxu0 0.0
        %1253 = vmatprep.subr.mxu0 0.0
        %1254 = vmatpush1.msra.mxu0 0.0
        %1255 = vmatprep.mubr.f32.mxu0 0.0
        %1256 = vmatmul.mubr.f32.gmra.mrb[0].mxu0 %v1047
        %v1257 = vpop.f32.mrb[0].mxu0
        %v1258 = vadd.f32 %v985, %v1257
        %v1259 = vpop.f32.mrb[0].mxu0
        %v1260 = vadd.f32 %v989, %v1259
        %1261 = vdwg.mxu0
        %1262 = vmatprep.subr.mxu0 %v905
        %1263 = vmatpush1.msra.mxu0 %v904
        %1264 = vmatprep.subr.mxu0 %v921
        %1265 = vmatpush1.msra.mxu0 %v920
        %1266 = vmatprep.subr.mxu0 %v937
        %1267 = vmatpush1.msra.mxu0 %v936
        %1268 = vmatprep.subr.mxu0 %v953
        %1269 = vmatpush1.msra.mxu0 %v952
        %1270 = vmatprep.subr.mxu0 0.0
        %1271 = vmatpush1.msra.mxu0 0.0
        %1272 = vmatprep.subr.mxu0 0.0
        %1273 = vmatpush1.msra.mxu0 0.0
        %1274 = vmatprep.subr.mxu0 0.0
        %1275 = vmatpush1.msra.mxu0 0.0
        %1276 = vmatprep.subr.mxu0 0.0
        %1277 = vmatpush1.msra.mxu0 0.0
        %1278 = vmatprep.subr.mxu0 0.0
        %1279 = vmatpush1.msra.mxu0 0.0
        %1280 = vmatprep.subr.mxu0 0.0
        %1281 = vmatpush1.msra.mxu0 0.0
        %1282 = vmatprep.subr.mxu0 0.0
        %1283 = vmatpush1.msra.mxu0 0.0
        %1284 = vmatprep.subr.mxu0 0.0
        %1285 = vmatpush1.msra.mxu0 0.0
        %1286 = vmatprep.subr.mxu0 0.0
        %1287 = vmatpush1.msra.mxu0 0.0
        %1288 = vmatprep.subr.mxu0 0.0
        %1289 = vmatpush1.msra.mxu0 0.0
        %1290 = vmatprep.subr.mxu0 0.0
        %1291 = vmatpush1.msra.mxu0 0.0
        %1292 = vmatprep.subr.mxu0 0.0
        %1293 = vmatpush1.msra.mxu0 0.0
        %1294 = vmatprep.subr.mxu0 0.0
        %1295 = vmatpush1.msra.mxu0 0.0
        %1296 = vmatprep.subr.mxu0 0.0
        %1297 = vmatpush1.msra.mxu0 0.0
        %1298 = vmatprep.subr.mxu0 0.0
        %1299 = vmatpush1.msra.mxu0 0.0
        %1300 = vmatprep.subr.mxu0 0.0
        %1301 = vmatpush1.msra.mxu0 0.0
        %1302 = vmatprep.subr.mxu0 0.0
        %1303 = vmatpush1.msra.mxu0 0.0
        %1304 = vmatprep.subr.mxu0 0.0
        %1305 = vmatpush1.msra.mxu0 0.0
        %1306 = vmatprep.subr.mxu0 0.0
        %1307 = vmatpush1.msra.mxu0 0.0
        %1308 = vmatprep.subr.mxu0 0.0
        %1309 = vmatpush1.msra.mxu0 0.0
        %1310 = vmatprep.subr.mxu0 0.0
        %1311 = vmatpush1.msra.mxu0 0.0
        %1312 = vmatprep.subr.mxu0 0.0
        %1313 = vmatpush1.msra.mxu0 0.0
        %1314 = vmatprep.subr.mxu0 0.0
        %1315 = vmatpush1.msra.mxu0 0.0
        %1316 = vmatprep.subr.mxu0 0.0
        %1317 = vmatpush1.msra.mxu0 0.0
        %1318 = vmatprep.subr.mxu0 0.0
        %1319 = vmatpush1.msra.mxu0 0.0
        %1320 = vmatprep.subr.mxu0 0.0
        %1321 = vmatpush1.msra.mxu0 0.0
        %1322 = vmatprep.subr.mxu0 0.0
        %1323 = vmatpush1.msra.mxu0 0.0
        %1324 = vmatprep.subr.mxu0 0.0
        %1325 = vmatpush1.msra.mxu0 0.0
        %1326 = vmatprep.mubr.f32.mxu0 0.0
        %1327 = vmatmul.mubr.f32.gmra.mrb[0].mxu0 %v1047
        %v1328 = vpop.f32.mrb[0].mxu0
        %v1329 = vadd.f32 %v993, %v1328
        %v1330 = vpop.f32.mrb[0].mxu0
        %v1331 = vadd.f32 %v997, %v1330
        %1332 = vdwg.mxu0
        %1333 = vmatprep.subr.mxu0 %v907
        %1334 = vmatpush1.msra.mxu0 %v906
        %1335 = vmatprep.subr.mxu0 %v923
        %1336 = vmatpush1.msra.mxu0 %v922
        %1337 = vmatprep.subr.mxu0 %v939
        %1338 = vmatpush1.msra.mxu0 %v938
        %1339 = vmatprep.subr.mxu0 %v955
        %1340 = vmatpush1.msra.mxu0 %v954
        %1341 = vmatprep.subr.mxu0 0.0
        %1342 = vmatpush1.msra.mxu0 0.0
        %1343 = vmatprep.subr.mxu0 0.0
        %1344 = vmatpush1.msra.mxu0 0.0
        %1345 = vmatprep.subr.mxu0 0.0
        %1346 = vmatpush1.msra.mxu0 0.0
        %1347 = vmatprep.subr.mxu0 0.0
        %1348 = vmatpush1.msra.mxu0 0.0
        %1349 = vmatprep.subr.mxu0 0.0
        %1350 = vmatpush1.msra.mxu0 0.0
        %1351 = vmatprep.subr.mxu0 0.0
        %1352 = vmatpush1.msra.mxu0 0.0
        %1353 = vmatprep.subr.mxu0 0.0
        %1354 = vmatpush1.msra.mxu0 0.0
        %1355 = vmatprep.subr.mxu0 0.0
        %1356 = vmatpush1.msra.mxu0 0.0
        %1357 = vmatprep.subr.mxu0 0.0
        %1358 = vmatpush1.msra.mxu0 0.0
        %1359 = vmatprep.subr.mxu0 0.0
        %1360 = vmatpush1.msra.mxu0 0.0
        %1361 = vmatprep.subr.mxu0 0.0
        %1362 = vmatpush1.msra.mxu0 0.0
        %1363 = vmatprep.subr.mxu0 0.0
        %1364 = vmatpush1.msra.mxu0 0.0
        %1365 = vmatprep.subr.mxu0 0.0
        %1366 = vmatpush1.msra.mxu0 0.0
        %1367 = vmatprep.subr.mxu0 0.0
        %1368 = vmatpush1.msra.mxu0 0.0
        %1369 = vmatprep.subr.mxu0 0.0
        %1370 = vmatpush1.msra.mxu0 0.0
        %1371 = vmatprep.subr.mxu0 0.0
        %1372 = vmatpush1.msra.mxu0 0.0
        %1373 = vmatprep.subr.mxu0 0.0
        %1374 = vmatpush1.msra.mxu0 0.0
        %1375 = vmatprep.subr.mxu0 0.0
        %1376 = vmatpush1.msra.mxu0 0.0
        %1377 = vmatprep.subr.mxu0 0.0
        %1378 = vmatpush1.msra.mxu0 0.0
        %1379 = vmatprep.subr.mxu0 0.0
        %1380 = vmatpush1.msra.mxu0 0.0
        %1381 = vmatprep.subr.mxu0 0.0
        %1382 = vmatpush1.msra.mxu0 0.0
        %1383 = vmatprep.subr.mxu0 0.0
        %1384 = vmatpush1.msra.mxu0 0.0
        %1385 = vmatprep.subr.mxu0 0.0
        %1386 = vmatpush1.msra.mxu0 0.0
        %1387 = vmatprep.subr.mxu0 0.0
        %1388 = vmatpush1.msra.mxu0 0.0
        %1389 = vmatprep.subr.mxu0 0.0
        %1390 = vmatpush1.msra.mxu0 0.0
        %1391 = vmatprep.subr.mxu0 0.0
        %1392 = vmatpush1.msra.mxu0 0.0
        %1393 = vmatprep.subr.mxu0 0.0
        %1394 = vmatpush1.msra.mxu0 0.0
        %1395 = vmatprep.subr.mxu0 0.0
        %1396 = vmatpush1.msra.mxu0 0.0
        %1397 = vmatprep.mubr.f32.mxu0 0.0
        %1398 = vmatmul.mubr.f32.gmra.mrb[0].mxu0 %v1047
        %v1399 = vpop.f32.mrb[0].mxu0
        %v1400 = vadd.f32 %v1001, %v1399
        %v1401 = vpop.f32.mrb[0].mxu0
        %v1402 = vadd.f32 %v1005, %v1401
        %1403 = vdwg.mxu0
        %1404 = vmatprep.subr.mxu0 %v909
        %1405 = vmatpush1.msra.mxu0 %v908
        %1406 = vmatprep.subr.mxu0 %v925
        %1407 = vmatpush1.msra.mxu0 %v924
        %1408 = vmatprep.subr.mxu0 %v941
        %1409 = vmatpush1.msra.mxu0 %v940
        %1410 = vmatprep.subr.mxu0 %v957
        %1411 = vmatpush1.msra.mxu0 %v956
        %1412 = vmatprep.subr.mxu0 0.0
        %1413 = vmatpush1.msra.mxu0 0.0
        %1414 = vmatprep.subr.mxu0 0.0
        %1415 = vmatpush1.msra.mxu0 0.0
        %1416 = vmatprep.subr.mxu0 0.0
        %1417 = vmatpush1.msra.mxu0 0.0
        %1418 = vmatprep.subr.mxu0 0.0
        %1419 = vmatpush1.msra.mxu0 0.0
        %1420 = vmatprep.subr.mxu0 0.0
        %1421 = vmatpush1.msra.mxu0 0.0
        %1422 = vmatprep.subr.mxu0 0.0
        %1423 = vmatpush1.msra.mxu0 0.0
        %1424 = vmatprep.subr.mxu0 0.0
        %1425 = vmatpush1.msra.mxu0 0.0
        %1426 = vmatprep.subr.mxu0 0.0
        %1427 = vmatpush1.msra.mxu0 0.0
        %1428 = vmatprep.subr.mxu0 0.0
        %1429 = vmatpush1.msra.mxu0 0.0
        %1430 = vmatprep.subr.mxu0 0.0
        %1431 = vmatpush1.msra.mxu0 0.0
        %1432 = vmatprep.subr.mxu0 0.0
        %1433 = vmatpush1.msra.mxu0 0.0
        %1434 = vmatprep.subr.mxu0 0.0
        %1435 = vmatpush1.msra.mxu0 0.0
        %1436 = vmatprep.subr.mxu0 0.0
        %1437 = vmatpush1.msra.mxu0 0.0
        %1438 = vmatprep.subr.mxu0 0.0
        %1439 = vmatpush1.msra.mxu0 0.0
        %1440 = vmatprep.subr.mxu0 0.0
        %1441 = vmatpush1.msra.mxu0 0.0
        %1442 = vmatprep.subr.mxu0 0.0
        %1443 = vmatpush1.msra.mxu0 0.0
        %1444 = vmatprep.subr.mxu0 0.0
        %1445 = vmatpush1.msra.mxu0 0.0
        %1446 = vmatprep.subr.mxu0 0.0
        %1447 = vmatpush1.msra.mxu0 0.0
        %1448 = vmatprep.subr.mxu0 0.0
        %1449 = vmatpush1.msra.mxu0 0.0
        %1450 = vmatprep.subr.mxu0 0.0
        %1451 = vmatpush1.msra.mxu0 0.0
        %1452 = vmatprep.subr.mxu0 0.0
        %1453 = vmatpush1.msra.mxu0 0.0
        %1454 = vmatprep.subr.mxu0 0.0
        %1455 = vmatpush1.msra.mxu0 0.0
        %1456 = vmatprep.subr.mxu0 0.0
        %1457 = vmatpush1.msra.mxu0 0.0
        %1458 = vmatprep.subr.mxu0 0.0
        %1459 = vmatpush1.msra.mxu0 0.0
        %1460 = vmatprep.subr.mxu0 0.0
        %1461 = vmatpush1.msra.mxu0 0.0
        %1462 = vmatprep.subr.mxu0 0.0
        %1463 = vmatpush1.msra.mxu0 0.0
        %1464 = vmatprep.subr.mxu0 0.0
        %1465 = vmatpush1.msra.mxu0 0.0
        %1466 = vmatprep.subr.mxu0 0.0
        %1467 = vmatpush1.msra.mxu0 0.0
        %1468 = vmatprep.mubr.f32.mxu0 0.0
        %1469 = vmatmul.mubr.f32.gmra.mrb[0].mxu0 %v1047
        %v1470 = vpop.f32.mrb[0].mxu0
        %v1471 = vadd.f32 %v1009, %v1470
        %v1472 = vpop.f32.mrb[0].mxu0
        %v1473 = vadd.f32 %v1013, %v1472
        %1474 = vdwg.mxu0
        %1475 = vmatprep.subr.mxu0 %v911
        %1476 = vmatpush1.msra.mxu0 %v910
        %1477 = vmatprep.subr.mxu0 %v927
        %1478 = vmatpush1.msra.mxu0 %v926
        %1479 = vmatprep.subr.mxu0 %v943
        %1480 = vmatpush1.msra.mxu0 %v942
        %1481 = vmatprep.subr.mxu0 %v959
        %1482 = vmatpush1.msra.mxu0 %v958
        %1483 = vmatprep.subr.mxu0 0.0
        %1484 = vmatpush1.msra.mxu0 0.0
        %1485 = vmatprep.subr.mxu0 0.0
        %1486 = vmatpush1.msra.mxu0 0.0
        %1487 = vmatprep.subr.mxu0 0.0
        %1488 = vmatpush1.msra.mxu0 0.0
        %1489 = vmatprep.subr.mxu0 0.0
        %1490 = vmatpush1.msra.mxu0 0.0
        %1491 = vmatprep.subr.mxu0 0.0
        %1492 = vmatpush1.msra.mxu0 0.0
        %1493 = vmatprep.subr.mxu0 0.0
        %1494 = vmatpush1.msra.mxu0 0.0
        %1495 = vmatprep.subr.mxu0 0.0
        %1496 = vmatpush1.msra.mxu0 0.0
        %1497 = vmatprep.subr.mxu0 0.0
        %1498 = vmatpush1.msra.mxu0 0.0
        %1499 = vmatprep.subr.mxu0 0.0
        %1500 = vmatpush1.msra.mxu0 0.0
        %1501 = vmatprep.subr.mxu0 0.0
        %1502 = vmatpush1.msra.mxu0 0.0
        %1503 = vmatprep.subr.mxu0 0.0
        %1504 = vmatpush1.msra.mxu0 0.0
        %1505 = vmatprep.subr.mxu0 0.0
        %1506 = vmatpush1.msra.mxu0 0.0
        %1507 = vmatprep.subr.mxu0 0.0
        %1508 = vmatpush1.msra.mxu0 0.0
        %1509 = vmatprep.subr.mxu0 0.0
        %1510 = vmatpush1.msra.mxu0 0.0
        %1511 = vmatprep.subr.mxu0 0.0
        %1512 = vmatpush1.msra.mxu0 0.0
        %1513 = vmatprep.subr.mxu0 0.0
        %1514 = vmatpush1.msra.mxu0 0.0
        %1515 = vmatprep.subr.mxu0 0.0
        %1516 = vmatpush1.msra.mxu0 0.0
        %1517 = vmatprep.subr.mxu0 0.0
        %1518 = vmatpush1.msra.mxu0 0.0
        %1519 = vmatprep.subr.mxu0 0.0
        %1520 = vmatpush1.msra.mxu0 0.0
        %1521 = vmatprep.subr.mxu0 0.0
        %1522 = vmatpush1.msra.mxu0 0.0
        %1523 = vmatprep.subr.mxu0 0.0
        %1524 = vmatpush1.msra.mxu0 0.0
        %1525 = vmatprep.subr.mxu0 0.0
        %1526 = vmatpush1.msra.mxu0 0.0
        %1527 = vmatprep.subr.mxu0 0.0
        %1528 = vmatpush1.msra.mxu0 0.0
        %1529 = vmatprep.subr.mxu0 0.0
        %1530 = vmatpush1.msra.mxu0 0.0
        %1531 = vmatprep.subr.mxu0 0.0
        %1532 = vmatpush1.msra.mxu0 0.0
        %1533 = vmatprep.subr.mxu0 0.0
        %1534 = vmatpush1.msra.mxu0 0.0
        %1535 = vmatprep.subr.mxu0 0.0
        %1536 = vmatpush1.msra.mxu0 0.0
        %1537 = vmatprep.subr.mxu0 0.0
        %1538 = vmatpush1.msra.mxu0 0.0
        %1539 = vmatprep.mubr.f32.mxu0 0.0
        %1540 = vmatmul.mubr.f32.gmra.mrb[0].mxu0 %v1047
        %v1541 = vpop.f32.mrb[0].mxu0
        %v1542 = vadd.f32 %v1017, %v1541
        %v1543 = vpop.f32.mrb[0].mxu0
        %v1544 = vadd.f32 %v1021, %v1543
        %1545 = vdwg.mxu0
        %1546 = vmatprep.subr.mxu0 %v913
        %1547 = vmatpush1.msra.mxu0 %v912
        %1548 = vmatprep.subr.mxu0 %v929
        %1549 = vmatpush1.msra.mxu0 %v928
        %1550 = vmatprep.subr.mxu0 %v945
        %1551 = vmatpush1.msra.mxu0 %v944
        %1552 = vmatprep.subr.mxu0 %v961
        %1553 = vmatpush1.msra.mxu0 %v960
        %1554 = vmatprep.subr.mxu0 0.0
        %1555 = vmatpush1.msra.mxu0 0.0
        %1556 = vmatprep.subr.mxu0 0.0
        %1557 = vmatpush1.msra.mxu0 0.0
        %1558 = vmatprep.subr.mxu0 0.0
        %1559 = vmatpush1.msra.mxu0 0.0
        %1560 = vmatprep.subr.mxu0 0.0
        %1561 = vmatpush1.msra.mxu0 0.0
        %1562 = vmatprep.subr.mxu0 0.0
        %1563 = vmatpush1.msra.mxu0 0.0
        %1564 = vmatprep.subr.mxu0 0.0
        %1565 = vmatpush1.msra.mxu0 0.0
        %1566 = vmatprep.subr.mxu0 0.0
        %1567 = vmatpush1.msra.mxu0 0.0
        %1568 = vmatprep.subr.mxu0 0.0
        %1569 = vmatpush1.msra.mxu0 0.0
        %1570 = vmatprep.subr.mxu0 0.0
        %1571 = vmatpush1.msra.mxu0 0.0
        %1572 = vmatprep.subr.mxu0 0.0
        %1573 = vmatpush1.msra.mxu0 0.0
        %1574 = vmatprep.subr.mxu0 0.0
        %1575 = vmatpush1.msra.mxu0 0.0
        %1576 = vmatprep.subr.mxu0 0.0
        %1577 = vmatpush1.msra.mxu0 0.0
        %1578 = vmatprep.subr.mxu0 0.0
        %1579 = vmatpush1.msra.mxu0 0.0
        %1580 = vmatprep.subr.mxu0 0.0
        %1581 = vmatpush1.msra.mxu0 0.0
        %1582 = vmatprep.subr.mxu0 0.0
        %1583 = vmatpush1.msra.mxu0 0.0
        %1584 = vmatprep.subr.mxu0 0.0
        %1585 = vmatpush1.msra.mxu0 0.0
        %1586 = vmatprep.subr.mxu0 0.0
        %1587 = vmatpush1.msra.mxu0 0.0
        %1588 = vmatprep.subr.mxu0 0.0
        %1589 = vmatpush1.msra.mxu0 0.0
        %1590 = vmatprep.subr.mxu0 0.0
        %1591 = vmatpush1.msra.mxu0 0.0
        %1592 = vmatprep.subr.mxu0 0.0
        %1593 = vmatpush1.msra.mxu0 0.0
        %1594 = vmatprep.subr.mxu0 0.0
        %1595 = vmatpush1.msra.mxu0 0.0
        %1596 = vmatprep.subr.mxu0 0.0
        %1597 = vmatpush1.msra.mxu0 0.0
        %1598 = vmatprep.subr.mxu0 0.0
        %1599 = vmatpush1.msra.mxu0 0.0
        %1600 = vmatprep.subr.mxu0 0.0
        %1601 = vmatpush1.msra.mxu0 0.0
        %1602 = vmatprep.subr.mxu0 0.0
        %1603 = vmatpush1.msra.mxu0 0.0
        %1604 = vmatprep.subr.mxu0 0.0
        %1605 = vmatpush1.msra.mxu0 0.0
        %1606 = vmatprep.subr.mxu0 0.0
        %1607 = vmatpush1.msra.mxu0 0.0
        %1608 = vmatprep.subr.mxu0 0.0
        %1609 = vmatpush1.msra.mxu0 0.0
        %1610 = vmatprep.mubr.f32.mxu0 0.0
        %1611 = vmatmul.mubr.f32.gmra.mrb[0].mxu0 %v1047
        %v1612 = vpop.f32.mrb[0].mxu0
        %v1613 = vadd.f32 %v1025, %v1612
        %v1614 = vpop.f32.mrb[0].mxu0
        %v1615 = vadd.f32 %v1029, %v1614
        %1616 = vdwg.mxu0
        %v1617 = vmax.f32 %v1116, 0.0
        %v1618 = vmax.f32 %v1118, 0.0
        %v1619 = vmax.f32 %v1187, 0.0
        %v1620 = vmax.f32 %v1189, 0.0
        %v1621 = vmax.f32 %v1258, 0.0
        %v1622 = vmax.f32 %v1260, 0.0
        %v1623 = vmax.f32 %v1329, 0.0
        %v1624 = vmax.f32 %v1331, 0.0
        %v1625 = vmax.f32 %v1400, 0.0
        %v1626 = vmax.f32 %v1402, 0.0
        %v1627 = vmax.f32 %v1471, 0.0
        %v1628 = vmax.f32 %v1473, 0.0
        %v1629 = vmax.f32 %v1542, 0.0
        %v1630 = vmax.f32 %v1544, 0.0
        %v1631 = vmax.f32 %v1613, 0.0
        %v1632 = vmax.f32 %v1615, 0.0
        %v1633 = vld [vmem:[%s8] sm:$0xff]
        %v1634 = vld [vmem:[%s8 + $0x8] sm:$0xff]
        %v1635 = vld [vmem:[%s8 + $0x10] sm:$0xff]
        %v1636 = vld [vmem:[%s8 + $0x18] sm:$0xff]
        %v1637 = vld [vmem:[%s8 + $0x20] sm:$0xff]
        %v1638 = vld [vmem:[%s8 + $0x28] sm:$0xff]
        %v1639 = vld [vmem:[%s8 + $0x30] sm:$0xff]
        %v1640 = vld [vmem:[%s8 + $0x38] sm:$0xff]
        %v1641 = vld [vmem:[%s8 + $0x40] sm:$0xff]
        %v1642 = vld [vmem:[%s8 + $0x48] sm:$0xff]
        %v1643 = vld [vmem:[%s8 + $0x50] sm:$0xff]
        %v1644 = vld [vmem:[%s8 + $0x58] sm:$0xff]
        %v1645 = vld [vmem:[%s8 + $0x60] sm:$0xff]
        %v1646 = vld [vmem:[%s8 + $0x68] sm:$0xff]
        %v1647 = vld [vmem:[%s8 + $0x70] sm:$0xff]
        %v1648 = vld [vmem:[%s8 + $0x78] sm:$0xff]
        %v1649 = vld [vmem:[%s8 + $0x80] sm:$0xff]
        %v1650 = vld [vmem:[%s8 + $0x88] sm:$0xff]
        %v1651 = vld [vmem:[%s8 + $0x90] sm:$0xff]
        %v1652 = vld [vmem:[%s8 + $0x98] sm:$0xff]
        %v1653 = vld [vmem:[%s8 + $0xa0] sm:$0xff]
        %v1654 = vld [vmem:[%s8 + $0xa8] sm:$0xff]
        %v1655 = vld [vmem:[%s8 + $0xb0] sm:$0xff]
        %v1656 = vld [vmem:[%s8 + $0xb8] sm:$0xff]
        %v1657 = vld [vmem:[%s8 + $0xc0] sm:$0xff]
        %v1658 = vld [vmem:[%s8 + $0xc8] sm:$0xff]
        %v1659 = vld [vmem:[%s8 + $0xd0] sm:$0xff]
        %v1660 = vld [vmem:[%s8 + $0xd8] sm:$0xff]
        %v1661 = vld [vmem:[%s8 + $0xe0] sm:$0xff]
        %v1662 = vld [vmem:[%s8 + $0xe8] sm:$0xff]
        %v1663 = vld [vmem:[%s8 + $0xf0] sm:$0xff]
        %v1664 = vld [vmem:[%s8 + $0xf8] sm:$0xff]
        %v1665 = vld [vmem:[%s8 + $0x100] sm:$0xff]
        %v1666 = vld [vmem:[%s8 + $0x108] sm:$0xff]
        %v1667 = vld [vmem:[%s8 + $0x110] sm:$0xff]
        %v1668 = vld [vmem:[%s8 + $0x118] sm:$0xff]
        %v1669 = vld [vmem:[%s8 + $0x120] sm:$0xff]
        %v1670 = vld [vmem:[%s8 + $0x128] sm:$0xff]
        %v1671 = vld [vmem:[%s8 + $0x130] sm:$0xff]
        %v1672 = vld [vmem:[%s8 + $0x138] sm:$0xff]
        %v1673 = vld [vmem:[%s8 + $0x140] sm:$0xff]
        %v1674 = vld [vmem:[%s8 + $0x148] sm:$0xff]
        %v1675 = vld [vmem:[%s8 + $0x150] sm:$0xff]
        %v1676 = vld [vmem:[%s8 + $0x158] sm:$0xff]
        %v1677 = vld [vmem:[%s8 + $0x160] sm:$0xff]
        %v1678 = vld [vmem:[%s8 + $0x168] sm:$0xff]
        %v1679 = vld [vmem:[%s8 + $0x170] sm:$0xff]
        %v1680 = vld [vmem:[%s8 + $0x178] sm:$0xff]
        %v1681 = vld [vmem:[%s8 + $0x180] sm:$0xff]
        %v1682 = vld [vmem:[%s8 + $0x188] sm:$0xff]
        %v1683 = vld [vmem:[%s8 + $0x190] sm:$0xff]
        %v1684 = vld [vmem:[%s8 + $0x198] sm:$0xff]
        %v1685 = vld [vmem:[%s8 + $0x1a0] sm:$0xff]
        %v1686 = vld [vmem:[%s8 + $0x1a8] sm:$0xff]
        %v1687 = vld [vmem:[%s8 + $0x1b0] sm:$0xff]
        %v1688 = vld [vmem:[%s8 + $0x1b8] sm:$0xff]
        %v1689 = vld [vmem:[%s8 + $0x1c0] sm:$0xff]
        %v1690 = vld [vmem:[%s8 + $0x1c8] sm:$0xff]
        %v1691 = vld [vmem:[%s8 + $0x1d0] sm:$0xff]
        %v1692 = vld [vmem:[%s8 + $0x1d8] sm:$0xff]
        %v1693 = vld [vmem:[%s8 + $0x1e0] sm:$0xff]
        %v1694 = vld [vmem:[%s8 + $0x1e8] sm:$0xff]
        %v1695 = vld [vmem:[%s8 + $0x1f0] sm:$0xff]
        %v1696 = vld [vmem:[%s8 + $0x1f8] sm:$0xff]
        %v1697 = vld [vmem:[%s8 + $0x200] sm:$0xff]
        %v1698 = vld [vmem:[%s8 + $0x208] sm:$0xff]
        %v1699 = vld [vmem:[%s8 + $0x210] sm:$0xff]
        %v1700 = vld [vmem:[%s8 + $0x218] sm:$0xff]
        %v1701 = vld [vmem:[%s8 + $0x220] sm:$0xff]
        %v1702 = vld [vmem:[%s8 + $0x228] sm:$0xff]
        %v1703 = vld [vmem:[%s8 + $0x230] sm:$0xff]
        %v1704 = vld [vmem:[%s8 + $0x238] sm:$0xff]
        %v1705 = vld [vmem:[%s8 + $0x240] sm:$0xff]
        %v1706 = vld [vmem:[%s8 + $0x248] sm:$0xff]
        %v1707 = vld [vmem:[%s8 + $0x250] sm:$0xff]
        %v1708 = vld [vmem:[%s8 + $0x258] sm:$0xff]
        %v1709 = vld [vmem:[%s8 + $0x260] sm:$0xff]
        %v1710 = vld [vmem:[%s8 + $0x268] sm:$0xff]
        %v1711 = vld [vmem:[%s8 + $0x270] sm:$0xff]
        %v1712 = vld [vmem:[%s8 + $0x278] sm:$0xff]
        %v1713 = vld [vmem:[%s8 + $0x280] sm:$0xff]
        %v1714 = vld [vmem:[%s8 + $0x288] sm:$0xff]
        %v1715 = vld [vmem:[%s8 + $0x290] sm:$0xff]
        %v1716 = vld [vmem:[%s8 + $0x298] sm:$0xff]
        %v1717 = vld [vmem:[%s8 + $0x2a0] sm:$0xff]
        %v1718 = vld [vmem:[%s8 + $0x2a8] sm:$0xff]
        %v1719 = vld [vmem:[%s8 + $0x2b0] sm:$0xff]
        %v1720 = vld [vmem:[%s8 + $0x2b8] sm:$0xff]
        %v1721 = vld [vmem:[%s8 + $0x2c0] sm:$0xff]
        %v1722 = vld [vmem:[%s8 + $0x2c8] sm:$0xff]
        %v1723 = vld [vmem:[%s8 + $0x2d0] sm:$0xff]
        %v1724 = vld [vmem:[%s8 + $0x2d8] sm:$0xff]
        %v1725 = vld [vmem:[%s8 + $0x2e0] sm:$0xff]
        %v1726 = vld [vmem:[%s8 + $0x2e8] sm:$0xff]
        %v1727 = vld [vmem:[%s8 + $0x2f0] sm:$0xff]
        %v1728 = vld [vmem:[%s8 + $0x2f8] sm:$0xff]
        %v1729 = vld [vmem:[%s8 + $0x300] sm:$0xff]
        %v1730 = vld [vmem:[%s8 + $0x308] sm:$0xff]
        %v1731 = vld [vmem:[%s8 + $0x310] sm:$0xff]
        %v1732 = vld [vmem:[%s8 + $0x318] sm:$0xff]
        %v1733 = vld [vmem:[%s8 + $0x320] sm:$0xff]
        %v1734 = vld [vmem:[%s8 + $0x328] sm:$0xff]
        %v1735 = vld [vmem:[%s8 + $0x330] sm:$0xff]
        %v1736 = vld [vmem:[%s8 + $0x338] sm:$0xff]
        %v1737 = vld [vmem:[%s8 + $0x340] sm:$0xff]
        %v1738 = vld [vmem:[%s8 + $0x348] sm:$0xff]
        %v1739 = vld [vmem:[%s8 + $0x350] sm:$0xff]
        %v1740 = vld [vmem:[%s8 + $0x358] sm:$0xff]
        %v1741 = vld [vmem:[%s8 + $0x360] sm:$0xff]
        %v1742 = vld [vmem:[%s8 + $0x368] sm:$0xff]
        %v1743 = vld [vmem:[%s8 + $0x370] sm:$0xff]
        %v1744 = vld [vmem:[%s8 + $0x378] sm:$0xff]
        %v1745 = vld [vmem:[%s8 + $0x380] sm:$0xff]
        %v1746 = vld [vmem:[%s8 + $0x388] sm:$0xff]
        %v1747 = vld [vmem:[%s8 + $0x390] sm:$0xff]
        %v1748 = vld [vmem:[%s8 + $0x398] sm:$0xff]
        %v1749 = vld [vmem:[%s8 + $0x3a0] sm:$0xff]
        %v1750 = vld [vmem:[%s8 + $0x3a8] sm:$0xff]
        %v1751 = vld [vmem:[%s8 + $0x3b0] sm:$0xff]
        %v1752 = vld [vmem:[%s8 + $0x3b8] sm:$0xff]
        %v1753 = vld [vmem:[%s8 + $0x3c0] sm:$0xff]
        %v1754 = vld [vmem:[%s8 + $0x3c8] sm:$0xff]
        %v1755 = vld [vmem:[%s8 + $0x3d0] sm:$0xff]
        %v1756 = vld [vmem:[%s8 + $0x3d8] sm:$0xff]
        %v1757 = vld [vmem:[%s8 + $0x3e0] sm:$0xff]
        %v1758 = vld [vmem:[%s8 + $0x3e8] sm:$0xff]
        %v1759 = vld [vmem:[%s8 + $0x3f0] sm:$0xff]
        %v1760 = vld [vmem:[%s8 + $0x3f8] sm:$0xff]
        %v1761 = vld [vmem:[%s8 + $0x400] sm:$0xff]
        %v1762 = vld [vmem:[%s8 + $0x408] sm:$0xff]
        %v1763 = vld [vmem:[%s8 + $0x410] sm:$0xff]
        %v1764 = vld [vmem:[%s8 + $0x418] sm:$0xff]
        %v1765 = vld [vmem:[%s8 + $0x420] sm:$0xff]
        %v1766 = vld [vmem:[%s8 + $0x428] sm:$0xff]
        %v1767 = vld [vmem:[%s8 + $0x430] sm:$0xff]
        %v1768 = vld [vmem:[%s8 + $0x438] sm:$0xff]
        %v1769 = vld [vmem:[%s8 + $0x440] sm:$0xff]
        %v1770 = vld [vmem:[%s8 + $0x448] sm:$0xff]
        %v1771 = vld [vmem:[%s8 + $0x450] sm:$0xff]
        %v1772 = vld [vmem:[%s8 + $0x458] sm:$0xff]
        %v1773 = vld [vmem:[%s8 + $0x460] sm:$0xff]
        %v1774 = vld [vmem:[%s8 + $0x468] sm:$0xff]
        %v1775 = vld [vmem:[%s8 + $0x470] sm:$0xff]
        %v1776 = vld [vmem:[%s8 + $0x478] sm:$0xff]
        %v1777 = vld [vmem:[%s8 + $0x480] sm:$0xff]
        %v1778 = vld [vmem:[%s8 + $0x488] sm:$0xff]
        %v1779 = vld [vmem:[%s8 + $0x490] sm:$0xff]
        %v1780 = vld [vmem:[%s8 + $0x498] sm:$0xff]
        %v1781 = vld [vmem:[%s8 + $0x4a0] sm:$0xff]
        %v1782 = vld [vmem:[%s8 + $0x4a8] sm:$0xff]
        %v1783 = vld [vmem:[%s8 + $0x4b0] sm:$0xff]
        %v1784 = vld [vmem:[%s8 + $0x4b8] sm:$0xff]
        %v1785 = vld [vmem:[%s8 + $0x4c0] sm:$0xff]
        %v1786 = vld [vmem:[%s8 + $0x4c8] sm:$0xff]
        %v1787 = vld [vmem:[%s8 + $0x4d0] sm:$0xff]
        %v1788 = vld [vmem:[%s8 + $0x4d8] sm:$0xff]
        %v1789 = vld [vmem:[%s8 + $0x4e0] sm:$0xff]
        %v1790 = vld [vmem:[%s8 + $0x4e8] sm:$0xff]
        %v1791 = vld [vmem:[%s8 + $0x4f0] sm:$0xff]
        %v1792 = vld [vmem:[%s8 + $0x4f8] sm:$0xff]
        %v1793 = vld [vmem:[%s8 + $0x500] sm:$0xff]
        %v1794 = vld [vmem:[%s8 + $0x508] sm:$0xff]
        %v1795 = vld [vmem:[%s8 + $0x510] sm:$0xff]
        %v1796 = vld [vmem:[%s8 + $0x518] sm:$0xff]
        %v1797 = vld [vmem:[%s8 + $0x520] sm:$0xff]
        %v1798 = vld [vmem:[%s8 + $0x528] sm:$0xff]
        %v1799 = vld [vmem:[%s8 + $0x530] sm:$0xff]
        %v1800 = vld [vmem:[%s8 + $0x538] sm:$0xff]
        %v1801 = vld [vmem:[%s8 + $0x540] sm:$0xff]
        %v1802 = vld [vmem:[%s8 + $0x548] sm:$0xff]
        %v1803 = vld [vmem:[%s8 + $0x550] sm:$0xff]
        %v1804 = vld [vmem:[%s8 + $0x558] sm:$0xff]
        %v1805 = vld [vmem:[%s8 + $0x560] sm:$0xff]
        %v1806 = vld [vmem:[%s8 + $0x568] sm:$0xff]
        %v1807 = vld [vmem:[%s8 + $0x570] sm:$0xff]
        %v1808 = vld [vmem:[%s8 + $0x578] sm:$0xff]
        %v1809 = vld [vmem:[%s8 + $0x580] sm:$0xff]
        %v1810 = vld [vmem:[%s8 + $0x588] sm:$0xff]
        %v1811 = vld [vmem:[%s8 + $0x590] sm:$0xff]
        %v1812 = vld [vmem:[%s8 + $0x598] sm:$0xff]
        %v1813 = vld [vmem:[%s8 + $0x5a0] sm:$0xff]
        %v1814 = vld [vmem:[%s8 + $0x5a8] sm:$0xff]
        %v1815 = vld [vmem:[%s8 + $0x5b0] sm:$0xff]
        %v1816 = vld [vmem:[%s8 + $0x5b8] sm:$0xff]
        %v1817 = vld [vmem:[%s8 + $0x5c0] sm:$0xff]
        %v1818 = vld [vmem:[%s8 + $0x5c8] sm:$0xff]
        %v1819 = vld [vmem:[%s8 + $0x5d0] sm:$0xff]
        %v1820 = vld [vmem:[%s8 + $0x5d8] sm:$0xff]
        %v1821 = vld [vmem:[%s8 + $0x5e0] sm:$0xff]
        %v1822 = vld [vmem:[%s8 + $0x5e8] sm:$0xff]
        %v1823 = vld [vmem:[%s8 + $0x5f0] sm:$0xff]
        %v1824 = vld [vmem:[%s8 + $0x5f8] sm:$0xff]
        %v1825 = vld [vmem:[%s8 + $0x600] sm:$0xff]
        %v1826 = vld [vmem:[%s8 + $0x608] sm:$0xff]
        %v1827 = vld [vmem:[%s8 + $0x610] sm:$0xff]
        %v1828 = vld [vmem:[%s8 + $0x618] sm:$0xff]
        %v1829 = vld [vmem:[%s8 + $0x620] sm:$0xff]
        %v1830 = vld [vmem:[%s8 + $0x628] sm:$0xff]
        %v1831 = vld [vmem:[%s8 + $0x630] sm:$0xff]
        %v1832 = vld [vmem:[%s8 + $0x638] sm:$0xff]
        %v1833 = vld [vmem:[%s8 + $0x640] sm:$0xff]
        %v1834 = vld [vmem:[%s8 + $0x648] sm:$0xff]
        %v1835 = vld [vmem:[%s8 + $0x650] sm:$0xff]
        %v1836 = vld [vmem:[%s8 + $0x658] sm:$0xff]
        %v1837 = vld [vmem:[%s8 + $0x660] sm:$0xff]
        %v1838 = vld [vmem:[%s8 + $0x668] sm:$0xff]
        %v1839 = vld [vmem:[%s8 + $0x670] sm:$0xff]
        %v1840 = vld [vmem:[%s8 + $0x678] sm:$0xff]
        %v1841 = vld [vmem:[%s8 + $0x680] sm:$0xff]
        %v1842 = vld [vmem:[%s8 + $0x688] sm:$0xff]
        %v1843 = vld [vmem:[%s8 + $0x690] sm:$0xff]
        %v1844 = vld [vmem:[%s8 + $0x698] sm:$0xff]
        %v1845 = vld [vmem:[%s8 + $0x6a0] sm:$0xff]
        %v1846 = vld [vmem:[%s8 + $0x6a8] sm:$0xff]
        %v1847 = vld [vmem:[%s8 + $0x6b0] sm:$0xff]
        %v1848 = vld [vmem:[%s8 + $0x6b8] sm:$0xff]
        %v1849 = vld [vmem:[%s8 + $0x6c0] sm:$0xff]
        %v1850 = vld [vmem:[%s8 + $0x6c8] sm:$0xff]
        %v1851 = vld [vmem:[%s8 + $0x6d0] sm:$0xff]
        %v1852 = vld [vmem:[%s8 + $0x6d8] sm:$0xff]
        %v1853 = vld [vmem:[%s8 + $0x6e0] sm:$0xff]
        %v1854 = vld [vmem:[%s8 + $0x6e8] sm:$0xff]
        %v1855 = vld [vmem:[%s8 + $0x6f0] sm:$0xff]
        %v1856 = vld [vmem:[%s8 + $0x6f8] sm:$0xff]
        %v1857 = vld [vmem:[%s8 + $0x700] sm:$0xff]
        %v1858 = vld [vmem:[%s8 + $0x708] sm:$0xff]
        %v1859 = vld [vmem:[%s8 + $0x710] sm:$0xff]
        %v1860 = vld [vmem:[%s8 + $0x718] sm:$0xff]
        %v1861 = vld [vmem:[%s8 + $0x720] sm:$0xff]
        %v1862 = vld [vmem:[%s8 + $0x728] sm:$0xff]
        %v1863 = vld [vmem:[%s8 + $0x730] sm:$0xff]
        %v1864 = vld [vmem:[%s8 + $0x738] sm:$0xff]
        %v1865 = vld [vmem:[%s8 + $0x740] sm:$0xff]
        %v1866 = vld [vmem:[%s8 + $0x748] sm:$0xff]
        %v1867 = vld [vmem:[%s8 + $0x750] sm:$0xff]
        %v1868 = vld [vmem:[%s8 + $0x758] sm:$0xff]
        %v1869 = vld [vmem:[%s8 + $0x760] sm:$0xff]
        %v1870 = vld [vmem:[%s8 + $0x768] sm:$0xff]
        %v1871 = vld [vmem:[%s8 + $0x770] sm:$0xff]
        %v1872 = vld [vmem:[%s8 + $0x778] sm:$0xff]
        %v1873 = vld [vmem:[%s8 + $0x780] sm:$0xff]
        %v1874 = vld [vmem:[%s8 + $0x788] sm:$0xff]
        %v1875 = vld [vmem:[%s8 + $0x790] sm:$0xff]
        %v1876 = vld [vmem:[%s8 + $0x798] sm:$0xff]
        %v1877 = vld [vmem:[%s8 + $0x7a0] sm:$0xff]
        %v1878 = vld [vmem:[%s8 + $0x7a8] sm:$0xff]
        %v1879 = vld [vmem:[%s8 + $0x7b0] sm:$0xff]
        %v1880 = vld [vmem:[%s8 + $0x7b8] sm:$0xff]
        %v1881 = vld [vmem:[%s8 + $0x7c0] sm:$0xff]
        %v1882 = vld [vmem:[%s8 + $0x7c8] sm:$0xff]
        %v1883 = vld [vmem:[%s8 + $0x7d0] sm:$0xff]
        %v1884 = vld [vmem:[%s8 + $0x7d8] sm:$0xff]
        %v1885 = vld [vmem:[%s8 + $0x7e0] sm:$0xff]
        %v1886 = vld [vmem:[%s8 + $0x7e8] sm:$0xff]
        %v1887 = vld [vmem:[%s8 + $0x7f0] sm:$0xff]
        %v1888 = vld [vmem:[%s8 + $0x7f8] sm:$0xff]
        %v1889 = vld [vmem:[%s9] sm:$0x1]
        %v1891 = vlaneseq
        %v1892 = vshrl.u32 %v1891, 7
        %v1893 = vsub.s32 0, %v1892
        %v1894 = vrot.slane %v1889, %v1893
        %1896 = vmatprep.subr.mxu0 0.0
        %1897 = vmatpush1.msra.mxu0 %v1633
        %1898 = vmatprep.subr.mxu0 0.0
        %1899 = vmatpush1.msra.mxu0 %v1634
        %1900 = vmatprep.subr.mxu0 0.0
        %1901 = vmatpush1.msra.mxu0 %v1635
        %1902 = vmatprep.subr.mxu0 0.0
        %1903 = vmatpush1.msra.mxu0 %v1636
        %1904 = vmatprep.subr.mxu0 0.0
        %1905 = vmatpush1.msra.mxu0 %v1637
        %1906 = vmatprep.subr.mxu0 0.0
        %1907 = vmatpush1.msra.mxu0 %v1638
        %1908 = vmatprep.subr.mxu0 0.0
        %1909 = vmatpush1.msra.mxu0 %v1639
        %1910 = vmatprep.subr.mxu0 0.0
        %1911 = vmatpush1.msra.mxu0 %v1640
        %1912 = vmatprep.subr.mxu0 0.0
        %1913 = vmatpush1.msra.mxu0 %v1641
        %1914 = vmatprep.subr.mxu0 0.0
        %1915 = vmatpush1.msra.mxu0 %v1642
        %1916 = vmatprep.subr.mxu0 0.0
        %1917 = vmatpush1.msra.mxu0 %v1643
        %1918 = vmatprep.subr.mxu0 0.0
        %1919 = vmatpush1.msra.mxu0 %v1644
        %1920 = vmatprep.subr.mxu0 0.0
        %1921 = vmatpush1.msra.mxu0 %v1645
        %1922 = vmatprep.subr.mxu0 0.0
        %1923 = vmatpush1.msra.mxu0 %v1646
        %1924 = vmatprep.subr.mxu0 0.0
        %1925 = vmatpush1.msra.mxu0 %v1647
        %1926 = vmatprep.subr.mxu0 0.0
        %1927 = vmatpush1.msra.mxu0 %v1648
        %1928 = vmatprep.subr.mxu0 0.0
        %1929 = vmatpush1.msra.mxu0 %v1649
        %1930 = vmatprep.subr.mxu0 0.0
        %1931 = vmatpush1.msra.mxu0 %v1650
        %1932 = vmatprep.subr.mxu0 0.0
        %1933 = vmatpush1.msra.mxu0 %v1651
        %1934 = vmatprep.subr.mxu0 0.0
        %1935 = vmatpush1.msra.mxu0 %v1652
        %1936 = vmatprep.subr.mxu0 0.0
        %1937 = vmatpush1.msra.mxu0 %v1653
        %1938 = vmatprep.subr.mxu0 0.0
        %1939 = vmatpush1.msra.mxu0 %v1654
        %1940 = vmatprep.subr.mxu0 0.0
        %1941 = vmatpush1.msra.mxu0 %v1655
        %1942 = vmatprep.subr.mxu0 0.0
        %1943 = vmatpush1.msra.mxu0 %v1656
        %1944 = vmatprep.subr.mxu0 0.0
        %1945 = vmatpush1.msra.mxu0 %v1657
        %1946 = vmatprep.subr.mxu0 0.0
        %1947 = vmatpush1.msra.mxu0 %v1658
        %1948 = vmatprep.subr.mxu0 0.0
        %1949 = vmatpush1.msra.mxu0 %v1659
        %1950 = vmatprep.subr.mxu0 0.0
        %1951 = vmatpush1.msra.mxu0 %v1660
        %1952 = vmatprep.subr.mxu0 0.0
        %1953 = vmatpush1.msra.mxu0 %v1661
        %1954 = vmatprep.subr.mxu0 0.0
        %1955 = vmatpush1.msra.mxu0 %v1662
        %1956 = vmatprep.subr.mxu0 0.0
        %1957 = vmatpush1.msra.mxu0 %v1663
        %1958 = vmatprep.subr.mxu0 0.0
        %1959 = vmatpush1.msra.mxu0 %v1664
        %1960 = vmatprep.mubr.f32.mxu0 %v1618
        %1961 = vmatmul.mubr.f32.gmra.mrb[0].mxu0 %v1617
        %v1962 = vpop.f32.mrb[0].mxu0
        %v1963 = vadd.f32 %v1894, %v1962
        %v1964 = vpop.f32.mrb[0].mxu0
        %1965 = vdwg.mxu0
        %1966 = vmatprep.subr.mxu0 0.0
        %1967 = vmatpush1.msra.mxu0 %v1665
        %1968 = vmatprep.subr.mxu0 0.0
        %1969 = vmatpush1.msra.mxu0 %v1666
        %1970 = vmatprep.subr.mxu0 0.0
        %1971 = vmatpush1.msra.mxu0 %v1667
        %1972 = vmatprep.subr.mxu0 0.0
        %1973 = vmatpush1.msra.mxu0 %v1668
        %1974 = vmatprep.subr.mxu0 0.0
        %1975 = vmatpush1.msra.mxu0 %v1669
        %1976 = vmatprep.subr.mxu0 0.0
        %1977 = vmatpush1.msra.mxu0 %v1670
        %1978 = vmatprep.subr.mxu0 0.0
        %1979 = vmatpush1.msra.mxu0 %v1671
        %1980 = vmatprep.subr.mxu0 0.0
        %1981 = vmatpush1.msra.mxu0 %v1672
        %1982 = vmatprep.subr.mxu0 0.0
        %1983 = vmatpush1.msra.mxu0 %v1673
        %1984 = vmatprep.subr.mxu0 0.0
        %1985 = vmatpush1.msra.mxu0 %v1674
        %1986 = vmatprep.subr.mxu0 0.0
        %1987 = vmatpush1.msra.mxu0 %v1675
        %1988 = vmatprep.subr.mxu0 0.0
        %1989 = vmatpush1.msra.mxu0 %v1676
        %1990 = vmatprep.subr.mxu0 0.0
        %1991 = vmatpush1.msra.mxu0 %v1677
        %1992 = vmatprep.subr.mxu0 0.0
        %1993 = vmatpush1.msra.mxu0 %v1678
        %1994 = vmatprep.subr.mxu0 0.0
        %1995 = vmatpush1.msra.mxu0 %v1679
        %1996 = vmatprep.subr.mxu0 0.0
        %1997 = vmatpush1.msra.mxu0 %v1680
        %1998 = vmatprep.subr.mxu0 0.0
        %1999 = vmatpush1.msra.mxu0 %v1681
        %2000 = vmatprep.subr.mxu0 0.0
        %2001 = vmatpush1.msra.mxu0 %v1682
        %2002 = vmatprep.subr.mxu0 0.0
        %2003 = vmatpush1.msra.mxu0 %v1683
        %2004 = vmatprep.subr.mxu0 0.0
        %2005 = vmatpush1.msra.mxu0 %v1684
        %2006 = vmatprep.subr.mxu0 0.0
        %2007 = vmatpush1.msra.mxu0 %v1685
        %2008 = vmatprep.subr.mxu0 0.0
        %2009 = vmatpush1.msra.mxu0 %v1686
        %2010 = vmatprep.subr.mxu0 0.0
        %2011 = vmatpush1.msra.mxu0 %v1687
        %2012 = vmatprep.subr.mxu0 0.0
        %2013 = vmatpush1.msra.mxu0 %v1688
        %2014 = vmatprep.subr.mxu0 0.0
        %2015 = vmatpush1.msra.mxu0 %v1689
        %2016 = vmatprep.subr.mxu0 0.0
        %2017 = vmatpush1.msra.mxu0 %v1690
        %2018 = vmatprep.subr.mxu0 0.0
        %2019 = vmatpush1.msra.mxu0 %v1691
        %2020 = vmatprep.subr.mxu0 0.0
        %2021 = vmatpush1.msra.mxu0 %v1692
        %2022 = vmatprep.subr.mxu0 0.0
        %2023 = vmatpush1.msra.mxu0 %v1693
        %2024 = vmatprep.subr.mxu0 0.0
        %2025 = vmatpush1.msra.mxu0 %v1694
        %2026 = vmatprep.subr.mxu0 0.0
        %2027 = vmatpush1.msra.mxu0 %v1695
        %2028 = vmatprep.subr.mxu0 0.0
        %2029 = vmatpush1.msra.mxu0 %v1696
        %2030 = vmatprep.mubr.f32.mxu0 %v1620
        %2031 = vmatmul.mubr.f32.gmra.mrb[0].mxu0 %v1619
        %v2032 = vpop.f32.mrb[0].mxu0
        %v2033 = vadd.f32 %v1963, %v2032
        %v2034 = vpop.f32.mrb[0].mxu0
        %2035 = vdwg.mxu0
        %2036 = vmatprep.subr.mxu0 0.0
        %2037 = vmatpush1.msra.mxu0 %v1697
        %2038 = vmatprep.subr.mxu0 0.0
        %2039 = vmatpush1.msra.mxu0 %v1698
        %2040 = vmatprep.subr.mxu0 0.0
        %2041 = vmatpush1.msra.mxu0 %v1699
        %2042 = vmatprep.subr.mxu0 0.0
        %2043 = vmatpush1.msra.mxu0 %v1700
        %2044 = vmatprep.subr.mxu0 0.0
        %2045 = vmatpush1.msra.mxu0 %v1701
        %2046 = vmatprep.subr.mxu0 0.0
        %2047 = vmatpush1.msra.mxu0 %v1702
        %2048 = vmatprep.subr.mxu0 0.0
        %2049 = vmatpush1.msra.mxu0 %v1703
        %2050 = vmatprep.subr.mxu0 0.0
        %2051 = vmatpush1.msra.mxu0 %v1704
        %2052 = vmatprep.subr.mxu0 0.0
        %2053 = vmatpush1.msra.mxu0 %v1705
        %2054 = vmatprep.subr.mxu0 0.0
        %2055 = vmatpush1.msra.mxu0 %v1706
        %2056 = vmatprep.subr.mxu0 0.0
        %2057 = vmatpush1.msra.mxu0 %v1707
        %2058 = vmatprep.subr.mxu0 0.0
        %2059 = vmatpush1.msra.mxu0 %v1708
        %2060 = vmatprep.subr.mxu0 0.0
        %2061 = vmatpush1.msra.mxu0 %v1709
        %2062 = vmatprep.subr.mxu0 0.0
        %2063 = vmatpush1.msra.mxu0 %v1710
        %2064 = vmatprep.subr.mxu0 0.0
        %2065 = vmatpush1.msra.mxu0 %v1711
        %2066 = vmatprep.subr.mxu0 0.0
        %2067 = vmatpush1.msra.mxu0 %v1712
        %2068 = vmatprep.subr.mxu0 0.0
        %2069 = vmatpush1.msra.mxu0 %v1713
        %2070 = vmatprep.subr.mxu0 0.0
        %2071 = vmatpush1.msra.mxu0 %v1714
        %2072 = vmatprep.subr.mxu0 0.0
        %2073 = vmatpush1.msra.mxu0 %v1715
        %2074 = vmatprep.subr.mxu0 0.0
        %2075 = vmatpush1.msra.mxu0 %v1716
        %2076 = vmatprep.subr.mxu0 0.0
        %2077 = vmatpush1.msra.mxu0 %v1717
        %2078 = vmatprep.subr.mxu0 0.0
        %2079 = vmatpush1.msra.mxu0 %v1718
        %2080 = vmatprep.subr.mxu0 0.0
        %2081 = vmatpush1.msra.mxu0 %v1719
        %2082 = vmatprep.subr.mxu0 0.0
        %2083 = vmatpush1.msra.mxu0 %v1720
        %2084 = vmatprep.subr.mxu0 0.0
        %2085 = vmatpush1.msra.mxu0 %v1721
        %2086 = vmatprep.subr.mxu0 0.0
        %2087 = vmatpush1.msra.mxu0 %v1722
        %2088 = vmatprep.subr.mxu0 0.0
        %2089 = vmatpush1.msra.mxu0 %v1723
        %2090 = vmatprep.subr.mxu0 0.0
        %2091 = vmatpush1.msra.mxu0 %v1724
        %2092 = vmatprep.subr.mxu0 0.0
        %2093 = vmatpush1.msra.mxu0 %v1725
        %2094 = vmatprep.subr.mxu0 0.0
        %2095 = vmatpush1.msra.mxu0 %v1726
        %2096 = vmatprep.subr.mxu0 0.0
        %2097 = vmatpush1.msra.mxu0 %v1727
        %2098 = vmatprep.subr.mxu0 0.0
        %2099 = vmatpush1.msra.mxu0 %v1728
        %2100 = vmatprep.mubr.f32.mxu0 %v1622
        %2101 = vmatmul.mubr.f32.gmra.mrb[0].mxu0 %v1621
        %v2102 = vpop.f32.mrb[0].mxu0
        %v2103 = vadd.f32 %v2033, %v2102
        %v2104 = vpop.f32.mrb[0].mxu0
        %2105 = vdwg.mxu0
        %2106 = vmatprep.subr.mxu0 0.0
        %2107 = vmatpush1.msra.mxu0 %v1729
        %2108 = vmatprep.subr.mxu0 0.0
        %2109 = vmatpush1.msra.mxu0 %v1730
        %2110 = vmatprep.subr.mxu0 0.0
        %2111 = vmatpush1.msra.mxu0 %v1731
        %2112 = vmatprep.subr.mxu0 0.0
        %2113 = vmatpush1.msra.mxu0 %v1732
        %2114 = vmatprep.subr.mxu0 0.0
        %2115 = vmatpush1.msra.mxu0 %v1733
        %2116 = vmatprep.subr.mxu0 0.0
        %2117 = vmatpush1.msra.mxu0 %v1734
        %2118 = vmatprep.subr.mxu0 0.0
        %2119 = vmatpush1.msra.mxu0 %v1735
        %2120 = vmatprep.subr.mxu0 0.0
        %2121 = vmatpush1.msra.mxu0 %v1736
        %2122 = vmatprep.subr.mxu0 0.0
        %2123 = vmatpush1.msra.mxu0 %v1737
        %2124 = vmatprep.subr.mxu0 0.0
        %2125 = vmatpush1.msra.mxu0 %v1738
        %2126 = vmatprep.subr.mxu0 0.0
        %2127 = vmatpush1.msra.mxu0 %v1739
        %2128 = vmatprep.subr.mxu0 0.0
        %2129 = vmatpush1.msra.mxu0 %v1740
        %2130 = vmatprep.subr.mxu0 0.0
        %2131 = vmatpush1.msra.mxu0 %v1741
        %2132 = vmatprep.subr.mxu0 0.0
        %2133 = vmatpush1.msra.mxu0 %v1742
        %2134 = vmatprep.subr.mxu0 0.0
        %2135 = vmatpush1.msra.mxu0 %v1743
        %2136 = vmatprep.subr.mxu0 0.0
        %2137 = vmatpush1.msra.mxu0 %v1744
        %2138 = vmatprep.subr.mxu0 0.0
        %2139 = vmatpush1.msra.mxu0 %v1745
        %2140 = vmatprep.subr.mxu0 0.0
        %2141 = vmatpush1.msra.mxu0 %v1746
        %2142 = vmatprep.subr.mxu0 0.0
        %2143 = vmatpush1.msra.mxu0 %v1747
        %2144 = vmatprep.subr.mxu0 0.0
        %2145 = vmatpush1.msra.mxu0 %v1748
        %2146 = vmatprep.subr.mxu0 0.0
        %2147 = vmatpush1.msra.mxu0 %v1749
        %2148 = vmatprep.subr.mxu0 0.0
        %2149 = vmatpush1.msra.mxu0 %v1750
        %2150 = vmatprep.subr.mxu0 0.0
        %2151 = vmatpush1.msra.mxu0 %v1751
        %2152 = vmatprep.subr.mxu0 0.0
        %2153 = vmatpush1.msra.mxu0 %v1752
        %2154 = vmatprep.subr.mxu0 0.0
        %2155 = vmatpush1.msra.mxu0 %v1753
        %2156 = vmatprep.subr.mxu0 0.0
        %2157 = vmatpush1.msra.mxu0 %v1754
        %2158 = vmatprep.subr.mxu0 0.0
        %2159 = vmatpush1.msra.mxu0 %v1755
        %2160 = vmatprep.subr.mxu0 0.0
        %2161 = vmatpush1.msra.mxu0 %v1756
        %2162 = vmatprep.subr.mxu0 0.0
        %2163 = vmatpush1.msra.mxu0 %v1757
        %2164 = vmatprep.subr.mxu0 0.0
        %2165 = vmatpush1.msra.mxu0 %v1758
        %2166 = vmatprep.subr.mxu0 0.0
        %2167 = vmatpush1.msra.mxu0 %v1759
        %2168 = vmatprep.subr.mxu0 0.0
        %2169 = vmatpush1.msra.mxu0 %v1760
        %2170 = vmatprep.mubr.f32.mxu0 %v1624
        %2171 = vmatmul.mubr.f32.gmra.mrb[0].mxu0 %v1623
        %v2172 = vpop.f32.mrb[0].mxu0
        %v2173 = vadd.f32 %v2103, %v2172
        %v2174 = vpop.f32.mrb[0].mxu0
        %2175 = vdwg.mxu0
        %2176 = vmatprep.subr.mxu0 0.0
        %2177 = vmatpush1.msra.mxu0 %v1761
        %2178 = vmatprep.subr.mxu0 0.0
        %2179 = vmatpush1.msra.mxu0 %v1762
        %2180 = vmatprep.subr.mxu0 0.0
        %2181 = vmatpush1.msra.mxu0 %v1763
        %2182 = vmatprep.subr.mxu0 0.0
        %2183 = vmatpush1.msra.mxu0 %v1764
        %2184 = vmatprep.subr.mxu0 0.0
        %2185 = vmatpush1.msra.mxu0 %v1765
        %2186 = vmatprep.subr.mxu0 0.0
        %2187 = vmatpush1.msra.mxu0 %v1766
        %2188 = vmatprep.subr.mxu0 0.0
        %2189 = vmatpush1.msra.mxu0 %v1767
        %2190 = vmatprep.subr.mxu0 0.0
        %2191 = vmatpush1.msra.mxu0 %v1768
        %2192 = vmatprep.subr.mxu0 0.0
        %2193 = vmatpush1.msra.mxu0 %v1769
        %2194 = vmatprep.subr.mxu0 0.0
        %2195 = vmatpush1.msra.mxu0 %v1770
        %2196 = vmatprep.subr.mxu0 0.0
        %2197 = vmatpush1.msra.mxu0 %v1771
        %2198 = vmatprep.subr.mxu0 0.0
        %2199 = vmatpush1.msra.mxu0 %v1772
        %2200 = vmatprep.subr.mxu0 0.0
        %2201 = vmatpush1.msra.mxu0 %v1773
        %2202 = vmatprep.subr.mxu0 0.0
        %2203 = vmatpush1.msra.mxu0 %v1774
        %2204 = vmatprep.subr.mxu0 0.0
        %2205 = vmatpush1.msra.mxu0 %v1775
        %2206 = vmatprep.subr.mxu0 0.0
        %2207 = vmatpush1.msra.mxu0 %v1776
        %2208 = vmatprep.subr.mxu0 0.0
        %2209 = vmatpush1.msra.mxu0 %v1777
        %2210 = vmatprep.subr.mxu0 0.0
        %2211 = vmatpush1.msra.mxu0 %v1778
        %2212 = vmatprep.subr.mxu0 0.0
        %2213 = vmatpush1.msra.mxu0 %v1779
        %2214 = vmatprep.subr.mxu0 0.0
        %2215 = vmatpush1.msra.mxu0 %v1780
        %2216 = vmatprep.subr.mxu0 0.0
        %2217 = vmatpush1.msra.mxu0 %v1781
        %2218 = vmatprep.subr.mxu0 0.0
        %2219 = vmatpush1.msra.mxu0 %v1782
        %2220 = vmatprep.subr.mxu0 0.0
        %2221 = vmatpush1.msra.mxu0 %v1783
        %2222 = vmatprep.subr.mxu0 0.0
        %2223 = vmatpush1.msra.mxu0 %v1784
        %2224 = vmatprep.subr.mxu0 0.0
        %2225 = vmatpush1.msra.mxu0 %v1785
        %2226 = vmatprep.subr.mxu0 0.0
        %2227 = vmatpush1.msra.mxu0 %v1786
        %2228 = vmatprep.subr.mxu0 0.0
        %2229 = vmatpush1.msra.mxu0 %v1787
        %2230 = vmatprep.subr.mxu0 0.0
        %2231 = vmatpush1.msra.mxu0 %v1788
        %2232 = vmatprep.subr.mxu0 0.0
        %2233 = vmatpush1.msra.mxu0 %v1789
        %2234 = vmatprep.subr.mxu0 0.0
        %2235 = vmatpush1.msra.mxu0 %v1790
        %2236 = vmatprep.subr.mxu0 0.0
        %2237 = vmatpush1.msra.mxu0 %v1791
        %2238 = vmatprep.subr.mxu0 0.0
        %2239 = vmatpush1.msra.mxu0 %v1792
        %2240 = vmatprep.mubr.f32.mxu0 %v1626
        %2241 = vmatmul.mubr.f32.gmra.mrb[0].mxu0 %v1625
        %v2242 = vpop.f32.mrb[0].mxu0
        %v2243 = vadd.f32 %v2173, %v2242
        %v2244 = vpop.f32.mrb[0].mxu0
        %2245 = vdwg.mxu0
        %2246 = vmatprep.subr.mxu0 0.0
        %2247 = vmatpush1.msra.mxu0 %v1793
        %2248 = vmatprep.subr.mxu0 0.0
        %2249 = vmatpush1.msra.mxu0 %v1794
        %2250 = vmatprep.subr.mxu0 0.0
        %2251 = vmatpush1.msra.mxu0 %v1795
        %2252 = vmatprep.subr.mxu0 0.0
        %2253 = vmatpush1.msra.mxu0 %v1796
        %2254 = vmatprep.subr.mxu0 0.0
        %2255 = vmatpush1.msra.mxu0 %v1797
        %2256 = vmatprep.subr.mxu0 0.0
        %2257 = vmatpush1.msra.mxu0 %v1798
        %2258 = vmatprep.subr.mxu0 0.0
        %2259 = vmatpush1.msra.mxu0 %v1799
        %2260 = vmatprep.subr.mxu0 0.0
        %2261 = vmatpush1.msra.mxu0 %v1800
        %2262 = vmatprep.subr.mxu0 0.0
        %2263 = vmatpush1.msra.mxu0 %v1801
        %2264 = vmatprep.subr.mxu0 0.0
        %2265 = vmatpush1.msra.mxu0 %v1802
        %2266 = vmatprep.subr.mxu0 0.0
        %2267 = vmatpush1.msra.mxu0 %v1803
        %2268 = vmatprep.subr.mxu0 0.0
        %2269 = vmatpush1.msra.mxu0 %v1804
        %2270 = vmatprep.subr.mxu0 0.0
        %2271 = vmatpush1.msra.mxu0 %v1805
        %2272 = vmatprep.subr.mxu0 0.0
        %2273 = vmatpush1.msra.mxu0 %v1806
        %2274 = vmatprep.subr.mxu0 0.0
        %2275 = vmatpush1.msra.mxu0 %v1807
        %2276 = vmatprep.subr.mxu0 0.0
        %2277 = vmatpush1.msra.mxu0 %v1808
        %2278 = vmatprep.subr.mxu0 0.0
        %2279 = vmatpush1.msra.mxu0 %v1809
        %2280 = vmatprep.subr.mxu0 0.0
        %2281 = vmatpush1.msra.mxu0 %v1810
        %2282 = vmatprep.subr.mxu0 0.0
        %2283 = vmatpush1.msra.mxu0 %v1811
        %2284 = vmatprep.subr.mxu0 0.0
        %2285 = vmatpush1.msra.mxu0 %v1812
        %2286 = vmatprep.subr.mxu0 0.0
        %2287 = vmatpush1.msra.mxu0 %v1813
        %2288 = vmatprep.subr.mxu0 0.0
        %2289 = vmatpush1.msra.mxu0 %v1814
        %2290 = vmatprep.subr.mxu0 0.0
        %2291 = vmatpush1.msra.mxu0 %v1815
        %2292 = vmatprep.subr.mxu0 0.0
        %2293 = vmatpush1.msra.mxu0 %v1816
        %2294 = vmatprep.subr.mxu0 0.0
        %2295 = vmatpush1.msra.mxu0 %v1817
        %2296 = vmatprep.subr.mxu0 0.0
        %2297 = vmatpush1.msra.mxu0 %v1818
        %2298 = vmatprep.subr.mxu0 0.0
        %2299 = vmatpush1.msra.mxu0 %v1819
        %2300 = vmatprep.subr.mxu0 0.0
        %2301 = vmatpush1.msra.mxu0 %v1820
        %2302 = vmatprep.subr.mxu0 0.0
        %2303 = vmatpush1.msra.mxu0 %v1821
        %2304 = vmatprep.subr.mxu0 0.0
        %2305 = vmatpush1.msra.mxu0 %v1822
        %2306 = vmatprep.subr.mxu0 0.0
        %2307 = vmatpush1.msra.mxu0 %v1823
        %2308 = vmatprep.subr.mxu0 0.0
        %2309 = vmatpush1.msra.mxu0 %v1824
        %2310 = vmatprep.mubr.f32.mxu0 %v1628
        %2311 = vmatmul.mubr.f32.gmra.mrb[0].mxu0 %v1627
        %v2312 = vpop.f32.mrb[0].mxu0
        %v2313 = vadd.f32 %v2243, %v2312
        %v2314 = vpop.f32.mrb[0].mxu0
        %2315 = vdwg.mxu0
        %2316 = vmatprep.subr.mxu0 0.0
        %2317 = vmatpush1.msra.mxu0 %v1825
        %2318 = vmatprep.subr.mxu0 0.0
        %2319 = vmatpush1.msra.mxu0 %v1826
        %2320 = vmatprep.subr.mxu0 0.0
        %2321 = vmatpush1.msra.mxu0 %v1827
        %2322 = vmatprep.subr.mxu0 0.0
        %2323 = vmatpush1.msra.mxu0 %v1828
        %2324 = vmatprep.subr.mxu0 0.0
        %2325 = vmatpush1.msra.mxu0 %v1829
        %2326 = vmatprep.subr.mxu0 0.0
        %2327 = vmatpush1.msra.mxu0 %v1830
        %2328 = vmatprep.subr.mxu0 0.0
        %2329 = vmatpush1.msra.mxu0 %v1831
        %2330 = vmatprep.subr.mxu0 0.0
        %2331 = vmatpush1.msra.mxu0 %v1832
        %2332 = vmatprep.subr.mxu0 0.0
        %2333 = vmatpush1.msra.mxu0 %v1833
        %2334 = vmatprep.subr.mxu0 0.0
        %2335 = vmatpush1.msra.mxu0 %v1834
        %2336 = vmatprep.subr.mxu0 0.0
        %2337 = vmatpush1.msra.mxu0 %v1835
        %2338 = vmatprep.subr.mxu0 0.0
        %2339 = vmatpush1.msra.mxu0 %v1836
        %2340 = vmatprep.subr.mxu0 0.0
        %2341 = vmatpush1.msra.mxu0 %v1837
        %2342 = vmatprep.subr.mxu0 0.0
        %2343 = vmatpush1.msra.mxu0 %v1838
        %2344 = vmatprep.subr.mxu0 0.0
        %2345 = vmatpush1.msra.mxu0 %v1839
        %2346 = vmatprep.subr.mxu0 0.0
        %2347 = vmatpush1.msra.mxu0 %v1840
        %2348 = vmatprep.subr.mxu0 0.0
        %2349 = vmatpush1.msra.mxu0 %v1841
        %2350 = vmatprep.subr.mxu0 0.0
        %2351 = vmatpush1.msra.mxu0 %v1842
        %2352 = vmatprep.subr.mxu0 0.0
        %2353 = vmatpush1.msra.mxu0 %v1843
        %2354 = vmatprep.subr.mxu0 0.0
        %2355 = vmatpush1.msra.mxu0 %v1844
        %2356 = vmatprep.subr.mxu0 0.0
        %2357 = vmatpush1.msra.mxu0 %v1845
        %2358 = vmatprep.subr.mxu0 0.0
        %2359 = vmatpush1.msra.mxu0 %v1846
        %2360 = vmatprep.subr.mxu0 0.0
        %2361 = vmatpush1.msra.mxu0 %v1847
        %2362 = vmatprep.subr.mxu0 0.0
        %2363 = vmatpush1.msra.mxu0 %v1848
        %2364 = vmatprep.subr.mxu0 0.0
        %2365 = vmatpush1.msra.mxu0 %v1849
        %2366 = vmatprep.subr.mxu0 0.0
        %2367 = vmatpush1.msra.mxu0 %v1850
        %2368 = vmatprep.subr.mxu0 0.0
        %2369 = vmatpush1.msra.mxu0 %v1851
        %2370 = vmatprep.subr.mxu0 0.0
        %2371 = vmatpush1.msra.mxu0 %v1852
        %2372 = vmatprep.subr.mxu0 0.0
        %2373 = vmatpush1.msra.mxu0 %v1853
        %2374 = vmatprep.subr.mxu0 0.0
        %2375 = vmatpush1.msra.mxu0 %v1854
        %2376 = vmatprep.subr.mxu0 0.0
        %2377 = vmatpush1.msra.mxu0 %v1855
        %2378 = vmatprep.subr.mxu0 0.0
        %2379 = vmatpush1.msra.mxu0 %v1856
        %2380 = vmatprep.mubr.f32.mxu0 %v1630
        %2381 = vmatmul.mubr.f32.gmra.mrb[0].mxu0 %v1629
        %v2382 = vpop.f32.mrb[0].mxu0
        %v2383 = vadd.f32 %v2313, %v2382
        %v2384 = vpop.f32.mrb[0].mxu0
        %2385 = vdwg.mxu0
        %2386 = vmatprep.subr.mxu0 0.0
        %2387 = vmatpush1.msra.mxu0 %v1857
        %2388 = vmatprep.subr.mxu0 0.0
        %2389 = vmatpush1.msra.mxu0 %v1858
        %2390 = vmatprep.subr.mxu0 0.0
        %2391 = vmatpush1.msra.mxu0 %v1859
        %2392 = vmatprep.subr.mxu0 0.0
        %2393 = vmatpush1.msra.mxu0 %v1860
        %2394 = vmatprep.subr.mxu0 0.0
        %2395 = vmatpush1.msra.mxu0 %v1861
        %2396 = vmatprep.subr.mxu0 0.0
        %2397 = vmatpush1.msra.mxu0 %v1862
        %2398 = vmatprep.subr.mxu0 0.0
        %2399 = vmatpush1.msra.mxu0 %v1863
        %2400 = vmatprep.subr.mxu0 0.0
        %2401 = vmatpush1.msra.mxu0 %v1864
        %2402 = vmatprep.subr.mxu0 0.0
        %2403 = vmatpush1.msra.mxu0 %v1865
        %2404 = vmatprep.subr.mxu0 0.0
        %2405 = vmatpush1.msra.mxu0 %v1866
        %2406 = vmatprep.subr.mxu0 0.0
        %2407 = vmatpush1.msra.mxu0 %v1867
        %2408 = vmatprep.subr.mxu0 0.0
        %2409 = vmatpush1.msra.mxu0 %v1868
        %2410 = vmatprep.subr.mxu0 0.0
        %2411 = vmatpush1.msra.mxu0 %v1869
        %2412 = vmatprep.subr.mxu0 0.0
        %2413 = vmatpush1.msra.mxu0 %v1870
        %2414 = vmatprep.subr.mxu0 0.0
        %2415 = vmatpush1.msra.mxu0 %v1871
        %2416 = vmatprep.subr.mxu0 0.0
        %2417 = vmatpush1.msra.mxu0 %v1872
        %2418 = vmatprep.subr.mxu0 0.0
        %2419 = vmatpush1.msra.mxu0 %v1873
        %2420 = vmatprep.subr.mxu0 0.0
        %2421 = vmatpush1.msra.mxu0 %v1874
        %2422 = vmatprep.subr.mxu0 0.0
        %2423 = vmatpush1.msra.mxu0 %v1875
        %2424 = vmatprep.subr.mxu0 0.0
        %2425 = vmatpush1.msra.mxu0 %v1876
        %2426 = vmatprep.subr.mxu0 0.0
        %2427 = vmatpush1.msra.mxu0 %v1877
        %2428 = vmatprep.subr.mxu0 0.0
        %2429 = vmatpush1.msra.mxu0 %v1878
        %2430 = vmatprep.subr.mxu0 0.0
        %2431 = vmatpush1.msra.mxu0 %v1879
        %2432 = vmatprep.subr.mxu0 0.0
        %2433 = vmatpush1.msra.mxu0 %v1880
        %2434 = vmatprep.subr.mxu0 0.0
        %2435 = vmatpush1.msra.mxu0 %v1881
        %2436 = vmatprep.subr.mxu0 0.0
        %2437 = vmatpush1.msra.mxu0 %v1882
        %2438 = vmatprep.subr.mxu0 0.0
        %2439 = vmatpush1.msra.mxu0 %v1883
        %2440 = vmatprep.subr.mxu0 0.0
        %2441 = vmatpush1.msra.mxu0 %v1884
        %2442 = vmatprep.subr.mxu0 0.0
        %2443 = vmatpush1.msra.mxu0 %v1885
        %2444 = vmatprep.subr.mxu0 0.0
        %2445 = vmatpush1.msra.mxu0 %v1886
        %2446 = vmatprep.subr.mxu0 0.0
        %2447 = vmatpush1.msra.mxu0 %v1887
        %2448 = vmatprep.subr.mxu0 0.0
        %2449 = vmatpush1.msra.mxu0 %v1888
        %2450 = vmatprep.mubr.f32.mxu0 %v1632
        %2451 = vmatmul.mubr.f32.gmra.mrb[0].mxu0 %v1631
        %v2452 = vpop.f32.mrb[0].mxu0
        %v2453 = vadd.f32 %v2383, %v2452
        %v2454 = vpop.f32.mrb[0].mxu0
        %2455 = vdwg.mxu0
        %v2456 = vadd.f32 %v2453, %v895
        %vm2457 = vcmp.ge.f32.partialorder %v2456, 0.0
        %v2458 = vmul.f32 %v2456, 0.01
        %v2459 = vsel %vm2457, %v2456, %v2458
        %v2460 = vsel %vm392, %v2459, 0.0
        %2461 = vadd.xlane.f32.xlu0 %v2460
        %v2462 = vpop.xlane.xlu0 %2461
        %v2463 = vmul.f32 %v2462, %v791
        %v2464 = vsub.f32 %v2459, %v2463
        %v2465 = vmul.f32 %v2464, %v2464
        %v2466 = vsel %vm392, %v2465, 0.0
        %2467 = vadd.xlane.f32.xlu0 %v2466
        %v2468 = vpop.xlane.xlu0 %2467
        %v2469 = vmul.f32 %v2468, %v791
        %v2470 = vadd.f32 %v2469, 1e-05
        %v2471 = vrsqrt.pop %v2470
        %v2472 = vmul.f32 %v2464, %v2471
        %v2473 = vld [vmem:[%s10] sm:$0x1]
        %v2474 = vlaneseq
        %v2475 = vshrl.u32 %v2474, 7
        %v2476 = vsub.s32 0, %v2475
        %v2477 = vrot.slane %v2473, %v2476
        %v2478 = vmul.f32 %v2472, %v2477
        %v2479 = vld [vmem:[%s10 + $0x1] sm:$0x1]
        %v2480 = vlaneseq
        %v2481 = vshrl.u32 %v2480, 7
        %v2482 = vsub.s32 0, %v2481
        %v2483 = vrot.slane %v2479, %v2482
        %v2484 = vadd.f32 %v2478, %v2483
        %2485 = vst.msk [vmem:[%s377] sm:$0xff] %vm392, %v2484
        %s2486 = sand.u32 %s269, 1
        %s2487 = scalar_lea.sflag [#allocation3], %s2486
        %s2488 = sand.u32 %s269, 1
        %s2489 = smul.addr %s2488, 8
        %s2490 = scalar_lea.vmem [#allocation2], %s2489
        // Predicated region
        $region65: #{tpu_custom_call.1} parent=63 // pred_check
          %p2491 = pneg %p279
        $region66: #{tpu_custom_call.1} parent=63 // pred_check_branch
          %2493 = sbr.rel (%p2491) target = $region68
        $region67: #{tpu_custom_call.1} parent=63 // pred_region
          %s2495 = ssub.s32 128, 128
          %2496 = vsyncadd %s2487, %s2495
          %s2497 = smul.addr %s25, 128
          %s2498 = scalar_lea.hbm %s11, %s2497
          %s2500 = sshll.u32 %s2490, 4
          %s2501 = int_to_ptr.vmem [resolvable:$true] %s2500
          %2503 = dma.vmem_to_hbm [thread:$0]  %s2501, 128, %s2498, %s2487
        $region68: #{tpu_custom_call.1} parent=63 // pred_fallthru
          _
      $region64: #{tpu_custom_call.1} parent=5 // pred_fallthru
        _
      %p2504 = scmp.le.s32.totalorder 2, %s20
      // Predicated region
      $region69: #{tpu_custom_call.1} parent=5 // pred_check
        %p2505 = pneg %p2504
      $region70: #{tpu_custom_call.1} parent=5 // pred_check_branch
        %2507 = sbr.rel (%p2505) target = $region72
      $region71: #{tpu_custom_call.1} parent=5 // pred_region
        %s2508 = ssub.s32 %s20, 2
        // Predicated region
        $region73: #{tpu_custom_call.1} parent=71 // pred_check
          %p2509 = pneg %p285
        $region74: #{tpu_custom_call.1} parent=71 // pred_check_branch
          %2511 = sbr.rel (%p2509) target = $region76
        $region75: #{tpu_custom_call.1} parent=71 // pred_region
          %s2512 = sand.u32 %s270, 1
          %s2513 = scalar_lea.sflag [#allocation3], %s2512
          %s2514 = sand.u32 %s270, 1
          %s2515 = smul.addr %s2514, 8
          %s2516 = scalar_lea.vmem [#allocation2], %s2515
          %2517 = dma.done %s2513, 128
        $region76: #{tpu_custom_call.1} parent=71 // pred_fallthru
          _
      $region72: #{tpu_custom_call.1} parent=5 // pred_fallthru
        _
    $region6: #{tpu_custom_call.1} parent=1 // loop_footer
      %s24 = sadd.s32 1, %s20
    $region7: #{tpu_custom_call.1} parent=1 // loop_footer_branch
      %19 = sbr.rel target = $region3
    $region8: #{tpu_custom_call.1} parent=1 // loop_exit
      _
    %2518 = vsyncpa [#allocation3], 1
    %s2519 = scalar_lea.sflag [#allocation3], 1
    %2520 = vsyncpa %s2519, 1

</llo_original>
